<compile_context>
chip_gen: v6e
topology: v6e:2x2x1
jax: 0.10.0
libtpu: 0.0.40
codegen_flags: <defaults>
</compile_context>

<pallas_src>
import functools
import math

import jax
import jax.numpy as jnp
from jax import lax
from jax.experimental import pallas as pl
from jax.experimental.pallas import tpu as pltpu


_VMEM_LIMIT_BYTES = 48 * 1024 * 1024  # above the 16/32 MiB defaults, headroom on v7x's 64 MiB


def _pick_tile(n, target, align):
    """Largest multiple of `align` that divides n and is <= target (else n itself = full dim)."""
    if n <= target:
        return n
    t = (target // align) * align
    while t >= align:
        if n % t == 0:
            return t
        t -= align
    return n


# ---------------------------------------------------------------------------
# Stage 1a: one GraphConvolution layer: out = relu(adj @ (x @ W) + b)
# grid = (N/TM, N/TK); axis 1 is the K-reduction over adj columns.
# ---------------------------------------------------------------------------
def _gcn_layer_kernel(adj_ref, x_ref, w_ref, b_ref, out_ref, acc_ref, *, relu):
    k = pl.program_id(1)

    @pl.when(k == 0)
    def _init():
        acc_ref[...] = jnp.zeros_like(acc_ref)

    # support for this K slab: (TK, F) @ (F, H) in f32 (F, H are tiny; recompute per row
    # tile is ~free compared to the adj dot), then fed to the MXU in bf16.
    support = jnp.dot(x_ref[...], w_ref[...], preferred_element_type=jnp.float32)
    acc_ref[...] += jnp.dot(adj_ref[...], support.astype(jnp.bfloat16),
                            preferred_element_type=jnp.float32)

    @pl.when(k == pl.num_programs(1) - 1)
    def _finalize():
        h = acc_ref[...] + b_ref[...]          # f32 elementwise (v5e has no bf16 VPU path)
        if relu:
            h = jnp.maximum(h, 0.0)
        out_ref[...] = h.astype(out_ref.dtype)


# ---------------------------------------------------------------------------
# Stage 1b: GCN layer 2 + linear head:
#   h2  = adj @ (h1 @ W2) + b2
#   lin = h2 @ Wl.T + bl           (Wl.T is pre-transposed in the wrapper)
# ---------------------------------------------------------------------------
def _gcn_linear_kernel(adj_ref, h1_ref, w2_ref, b2_ref, wlt_ref, bl_ref,
                       h2_ref, lin_ref, acc_ref):
    k = pl.program_id(1)

    @pl.when(k == 0)
    def _init():
        acc_ref[...] = jnp.zeros_like(acc_ref)

    support = jnp.dot(h1_ref[...], w2_ref[...], preferred_element_type=jnp.float32)
    acc_ref[...] += jnp.dot(adj_ref[...], support.astype(jnp.bfloat16),
                            preferred_element_type=jnp.float32)

    @pl.when(k == pl.num_programs(1) - 1)
    def _finalize():
        h2 = acc_ref[...] + b2_ref[...]
        lin = jnp.dot(h2, wlt_ref[...], preferred_element_type=jnp.float32) + bl_ref[...]
        # Stored in bf16: stage 2 re-reads each row block N/TN (resp. N/TM) times.
        h2_ref[...] = h2.astype(h2_ref.dtype)
        lin_ref[...] = lin.astype(lin_ref.dtype)


# ---------------------------------------------------------------------------
# Stage 2: out[i, j] = sigmoid(h2[i, :] . lin[j, :])
# NT contraction via dot_general -> no in-kernel transpose of lin.
# ---------------------------------------------------------------------------
def _similarity_kernel(h2_ref, lin_ref, out_ref):
    logits = lax.dot_general(h2_ref[...], lin_ref[...],
                             dimension_numbers=(((1,), (1,)), ((), ())),
                             preferred_element_type=jnp.float32)
    out_ref[...] = jax.nn.sigmoid(logits).astype(out_ref.dtype)


# ---------------------------------------------------------------------------
# Wrapper
# ---------------------------------------------------------------------------
def lp_generator_forward(x, adj, params, *, out_dtype=jnp.float32):
    """Fused LP_Generator forward pass (3 tiled pallas_calls)."""
    N, F = x.shape
    w1, b1, w2, b2, wl, bl = params
    H = w1.shape[1]
    O = w2.shape[1]

    compute_dtype = jnp.bfloat16
    # For a fixed graph reused across many calls, do this cast once outside.
    adj_c = adj.astype(compute_dtype)
    wl_t = wl.T                              # torch.nn.Linear convention: y = x @ W.T + b

    # Tile sizes (sized against the smallest VMEM generation, v7x = 64 MiB).
    TM = _pick_tile(N, 512, 8)               # sublane (row) tiles
    TK = _pick_tile(N, 512, 128)             # lane tiles of adj / reduction axis
    TN = _pick_tile(N, 512, 128)             # lane-dense output tiles (multiple of 128)

    gcn_compiler_params = pltpu.CompilerParams(
        dimension_semantics=("parallel", "arbitrary"),
        vmem_limit_bytes=_VMEM_LIMIT_BYTES)

    # ---- Stage 1a: h1 = relu(adj @ (x @ W1) + b1) ----
    h1 = pl.pallas_call(
        functools.partial(_gcn_layer_kernel, relu=True),
        out_shape=jax.ShapeDtypeStruct((N, H), compute_dtype),
        grid_spec=pltpu.PrefetchScalarGridSpec(
            num_scalar_prefetch=0,
            grid=(N // TM, N // TK),
            in_specs=[
                pl.BlockSpec((TM, TK), lambda i, k: (i, k)),   # adj (bf16)
                pl.BlockSpec((TK, F), lambda i, k: (k, 0)),    # x
                pl.BlockSpec((F, H), lambda i, k: (0, 0)),     # W1
                pl.BlockSpec((1, H), lambda i, k: (0, 0)),     # b1
            ],
            out_specs=pl.BlockSpec((TM, H), lambda i, k: (i, 0)),
            scratch_shapes=[pltpu.VMEM((TM, H), jnp.float32)]),
        compiler_params=gcn_compiler_params,
        cost_estimate=pl.CostEstimate(
            flops=2 * N * N * H + 2 * N * F * H * (N // TM),
            transcendentals=0,
            bytes_accessed=2 * N * N + 4 * N * F * (N // TM) + 2 * N * H),
    )(adj_c, x, w1, b1)

    # ---- Stage 1b: h2 = adj @ (h1 @ W2) + b2 ; lin = h2 @ Wl.T + bl ----
    h2, lin = pl.pallas_call(
        _gcn_linear_kernel,
        out_shape=(jax.ShapeDtypeStruct((N, O), compute_dtype),
                   jax.ShapeDtypeStruct((N, O), compute_dtype)),
        grid_spec=pltpu.PrefetchScalarGridSpec(
            num_scalar_prefetch=0,
            grid=(N // TM, N // TK),
            in_specs=[
                pl.BlockSpec((TM, TK), lambda i, k: (i, k)),   # adj (bf16)
                pl.BlockSpec((TK, H), lambda i, k: (k, 0)),    # h1 (bf16)
                pl.BlockSpec((H, O), lambda i, k: (0, 0)),     # W2
                pl.BlockSpec((1, O), lambda i, k: (0, 0)),     # b2
                pl.BlockSpec((O, O), lambda i, k: (0, 0)),     # Wl.T
                pl.BlockSpec((1, O), lambda i, k: (0, 0)),     # bl
            ],
            out_specs=[pl.BlockSpec((TM, O), lambda i, k: (i, 0)),
                       pl.BlockSpec((TM, O), lambda i, k: (i, 0))],
            scratch_shapes=[pltpu.VMEM((TM, O), jnp.float32)]),
        compiler_params=gcn_compiler_params,
        cost_estimate=pl.CostEstimate(
            flops=2 * N * N * O + 2 * N * H * O * (N // TM) + 2 * N * O * O,
            transcendentals=0,
            bytes_accessed=2 * N * N + 2 * N * H * (N // TM) + 2 * 2 * N * O),
    )(adj_c, h1, w2, b2, wl_t, bl)

    # ---- Stage 2: out = sigmoid(h2 @ lin.T), tiled over the [N, N] output ----
    out = pl.pallas_call(
        _similarity_kernel,
        out_shape=jax.ShapeDtypeStruct((N, N), out_dtype),
        grid_spec=pltpu.PrefetchScalarGridSpec(
            num_scalar_prefetch=0,
            grid=(N // TM, N // TN),
            in_specs=[
                pl.BlockSpec((TM, O), lambda i, j: (i, 0)),    # h2 row block
                pl.BlockSpec((TN, O), lambda i, j: (j, 0)),    # lin row block (contracted on dim 1)
            ],
            out_specs=pl.BlockSpec((TM, TN), lambda i, j: (i, j))),
        compiler_params=pltpu.CompilerParams(
            dimension_semantics=("parallel", "parallel"),      # both v7x TensorCores
            vmem_limit_bytes=_VMEM_LIMIT_BYTES),
        cost_estimate=pl.CostEstimate(
            flops=2 * N * N * O,
            transcendentals=N * N,
            bytes_accessed=N * N * jnp.dtype(out_dtype).itemsize
                           + 2 * N * O * ((N // TM) + (N // TN))),
    )(h2, lin)

    return out


# ---------------------------------------------------------------------------
# Params / reference
# ---------------------------------------------------------------------------
def init_params(key, num_feature, num_hidden, output_size):
    """Deterministic synthetic init matching the PyTorch module's shapes."""
    k = jax.random.split(key, 6)

    s1 = 1.0 / math.sqrt(num_hidden)
    w1 = jax.random.uniform(k[0], (num_feature, num_hidden), jnp.float32, -s1, s1)
    b1 = jax.random.uniform(k[1], (1, num_hidden), jnp.float32, -s1, s1)

    s2 = 1.0 / math.sqrt(output_size)
    w2 = jax.random.uniform(k[2], (num_hidden, output_size), jnp.float32, -s2, s2)
    b2 = jax.random.uniform(k[3], (1, output_size), jnp.float32, -s2, s2)

    sl = 1.0 / math.sqrt(output_size)
    wl = jax.random.uniform(k[4], (output_size, output_size), jnp.float32, -sl, sl)
    bl = jax.random.uniform(k[5], (1, output_size), jnp.float32, -sl, sl)

    return (w1, b1, w2, b2, wl, bl)


def reference_forward(x, adj, params):
    """Pure-JAX f32 reference."""
    w1, b1, w2, b2, wl, bl = params
    h1 = jax.nn.relu(adj @ (x @ w1) + b1)
    h2 = adj @ (h1 @ w2) + b2
    lin = h2 @ wl.T + bl
    return jax.nn.sigmoid(h2 @ lin.T)


if __name__ == "__main__":
    # Small shapes consistent with the module: N nodes, num_feature, num_hidden, output_size.
    N, num_feature, num_hidden, output_size = 64, 16, 32, 16

    key = jax.random.PRNGKey(0)
    kx, ka, kp = jax.random.split(key, 3)

    x = jax.random.normal(kx, (N, num_feature), jnp.float32)

    # Deterministic symmetric, row-normalized adjacency with self-loops.
    a = (jax.random.uniform(ka, (N, N)) > 0.5).astype(jnp.float32)
    a = jnp.maximum(a, a.T) + jnp.eye(N, dtype=jnp.float32)
    adj = a / jnp.sum(a, axis=1, keepdims=True)

    params = init_params(kp, num_feature, num_hidden, output_size)

    forward = jax.jit(lp_generator_forward)
    out = jax.block_until_ready(forward(x, adj, params))

    ref = reference_forward(x, adj, params)
    assert out.shape == (N, N)
    max_err = float(jnp.max(jnp.abs(out.astype(jnp.float32) - ref)))
    # bf16 MXU operands (f32 accumulation) -> loosened tolerance on the [0,1] sigmoid output.
    assert max_err < 2e-2, f"mismatch vs reference: max abs err {max_err}"

    print("KERNEL_OK")
</pallas_src>

<mosaic_0001>
module attributes {stable_mosaic.version = 11 : i64} {
  func.func @_gcn_layer_kernel(%arg0: i32, %arg1: i32, %arg2: memref<64x64xbf16, #tpu.memory_space<vmem>>, %arg3: memref<64x16xf32, #tpu.memory_space<vmem>>, %arg4: memref<16x32xf32, #tpu.memory_space<vmem>>, %arg5: memref<1x32xf32, #tpu.memory_space<vmem>>, %arg6: memref<64x32xbf16, #tpu.memory_space<vmem>>, %arg7: memref<64x32xf32, #tpu.memory_space<vmem>>) attributes {dimension_semantics = [#tpu.dimension_semantics<parallel>, #tpu.dimension_semantics<arbitrary>], iteration_bounds = array<i64: 1, 1>, scalar_prefetch = 0 : i64, scratch_operands = 1 : i64, tpu.core_type = #tpu.core_type<tc>, window_params = [{transform_indices = @transform_0, window_bounds = array<i64: 64, 64>}, {transform_indices = @transform_1, window_bounds = array<i64: 64, 16>}, {pipeline_mode = #tpu.pipeline_mode<synchronous>, transform_indices = @transform_2, window_bounds = array<i64: 16, 32>}, {pipeline_mode = #tpu.pipeline_mode<synchronous>, transform_indices = @transform_3, window_bounds = array<i64: 1, 32>}, {transform_indices = @transform_4, window_bounds = array<i64: 64, 32>}]} {
    %c0_i32 = arith.constant 0 : i32
    %0 = arith.cmpi eq, %arg1, %c0_i32 : i32
    %1 = arith.extui %0 : i1 to i32
    %c0_i32_0 = arith.constant 0 : i32
    %2 = arith.cmpi ne, %1, %c0_i32_0 : i32
    scf.if %2 {
      %cst_13 = arith.constant 0.000000e+00 : f32
      %15 = vector.broadcast %cst_13 : f32 to vector<64x32xf32>
      %c0_14 = arith.constant 0 : index
      %c0_15 = arith.constant 0 : index
      %16 = vector.load %arg7[%c0_14, %c0_15] : memref<64x32xf32, #tpu.memory_space<vmem>>, vector<64x32xf32>
      tpu.vector_store %arg7[%c0_14, %c0_15], %15 {strides = array<i32>} : memref<64x32xf32, #tpu.memory_space<vmem>>, vector<64x32xf32>,
    } else {
    }
    %c0 = arith.constant 0 : index
    %c0_1 = arith.constant 0 : index
    %3 = vector.load %arg3[%c0, %c0_1] : memref<64x16xf32, #tpu.memory_space<vmem>>, vector<64x16xf32>
    %c0_2 = arith.constant 0 : index
    %c0_3 = arith.constant 0 : index
    %4 = vector.load %arg4[%c0_2, %c0_3] : memref<16x32xf32, #tpu.memory_space<vmem>>, vector<16x32xf32>
    %cst = arith.constant dense<0.000000e+00> : vector<64x32xf32>
    %5 = tpu.matmul %3, %4, %cst {dimension_numbers = #tpu.dot_dimension_numbers<[1], [0], [0], [1], [0, 0, 1, 1], [], []>} : vector<64x16xf32>, vector<16x32xf32>, vector<64x32xf32> -> vector<64x32xf32>
    %c0_4 = arith.constant 0 : index
    %c0_5 = arith.constant 0 : index
    %6 = vector.load %arg7[%c0_4, %c0_5] : memref<64x32xf32, #tpu.memory_space<vmem>>, vector<64x32xf32>
    %c0_6 = arith.constant 0 : index
    %c0_7 = arith.constant 0 : index
    %7 = vector.load %arg2[%c0_6, %c0_7] : memref<64x64xbf16, #tpu.memory_space<vmem>>, vector<64x64xbf16>
    %8 = arith.truncf %5 : vector<64x32xf32> to vector<64x32xbf16>
    %cst_8 = arith.constant dense<0.000000e+00> : vector<64x32xf32>
    %9 = tpu.matmul %7, %8, %cst_8 {dimension_numbers = #tpu.dot_dimension_numbers<[1], [0], [0], [1], [0, 0, 1, 1], [], []>} : vector<64x64xbf16>, vector<64x32xbf16>, vector<64x32xf32> -> vector<64x32xf32>
    %10 = arith.addf %6, %9 : vector<64x32xf32>
    %c0_9 = arith.constant 0 : index
    %c0_10 = arith.constant 0 : index
    %11 = vector.load %arg7[%c0_9, %c0_10] : memref<64x32xf32, #tpu.memory_space<vmem>>, vector<64x32xf32>
    tpu.vector_store %arg7[%c0_9, %c0_10], %10 {strides = array<i32>} : memref<64x32xf32, #tpu.memory_space<vmem>>, vector<64x32xf32>,
    %c0_i32_11 = arith.constant 0 : i32
    %12 = arith.cmpi eq, %arg1, %c0_i32_11 : i32
    %13 = arith.extui %12 : i1 to i32
    %c0_i32_12 = arith.constant 0 : i32
    %14 = arith.cmpi ne, %13, %c0_i32_12 : i32
    scf.if %14 {
      %c0_13 = arith.constant 0 : index
      %c0_14 = arith.constant 0 : index
      %15 = vector.load %arg7[%c0_13, %c0_14] : memref<64x32xf32, #tpu.memory_space<vmem>>, vector<64x32xf32>
      %c0_15 = arith.constant 0 : index
      %c0_16 = arith.constant 0 : index
      %16 = vector.load %arg5[%c0_15, %c0_16] : memref<1x32xf32, #tpu.memory_space<vmem>>, vector<1x32xf32>
      %17 = vector.broadcast %16 : vector<1x32xf32> to vector<64x32xf32>
      %18 = arith.addf %15, %17 : vector<64x32xf32>
      %cst_17 = arith.constant 0.000000e+00 : f32
      %19 = vector.broadcast %cst_17 : f32 to vector<64x32xf32>
      %20 = arith.maximumf %18, %19 : vector<64x32xf32>
      %21 = arith.truncf %20 : vector<64x32xf32> to vector<64x32xbf16>
      %c0_18 = arith.constant 0 : index
      %c0_19 = arith.constant 0 : index
      %22 = vector.load %arg6[%c0_18, %c0_19] : memref<64x32xbf16, #tpu.memory_space<vmem>>, vector<64x32xbf16>
      tpu.vector_store %arg6[%c0_18, %c0_19], %21 {strides = array<i32>} : memref<64x32xbf16, #tpu.memory_space<vmem>>, vector<64x32xbf16>,
    } else {
    }
    return
  }
  func.func @transform_0(%arg0: i32, %arg1: i32) -> (i32, i32) {
    %c0_i32 = arith.constant 0 : i32
    return %arg0, %arg1 : i32, i32
  }
  func.func @transform_1(%arg0: i32, %arg1: i32) -> (i32, i32) {
    %c0_i32 = arith.constant 0 : i32
    %c0_i32_0 = arith.constant 0 : i32
    return %arg1, %c0_i32 : i32, i32
  }
  func.func @transform_2(%arg0: i32, %arg1: i32) -> (i32, i32) {
    %c0_i32 = arith.constant 0 : i32
    %c0_i32_0 = arith.constant 0 : i32
    %c0_i32_1 = arith.constant 0 : i32
    return %c0_i32, %c0_i32_0 : i32, i32
  }
  func.func @transform_3(%arg0: i32, %arg1: i32) -> (i32, i32) {
    %c0_i32 = arith.constant 0 : i32
    %c0_i32_0 = arith.constant 0 : i32
    %c0_i32_1 = arith.constant 0 : i32
    return %c0_i32, %c0_i32_0 : i32, i32
  }
  func.func @transform_4(%arg0: i32, %arg1: i32) -> (i32, i32) {
    %c0_i32 = arith.constant 0 : i32
    %c0_i32_0 = arith.constant 0 : i32
    return %arg0, %c0_i32 : i32, i32
  }
}

module attributes {stable_mosaic.version = 11 : i64} {
  func.func @_similarity_kernel(%arg0: i32, %arg1: i32, %arg2: memref<64x16xbf16, #tpu.memory_space<vmem>>, %arg3: memref<64x16xbf16, #tpu.memory_space<vmem>>, %arg4: memref<64x64xf32, #tpu.memory_space<vmem>>) attributes {dimension_semantics = [#tpu.dimension_semantics<parallel>, #tpu.dimension_semantics<parallel>], iteration_bounds = array<i64: 1, 1>, scalar_prefetch = 0 : i64, scratch_operands = 0 : i64, tpu.core_type = #tpu.core_type<tc>, window_params = [{transform_indices = @transform_0, window_bounds = array<i64: 64, 16>}, {transform_indices = @transform_1, window_bounds = array<i64: 64, 16>}, {transform_indices = @transform_2, window_bounds = array<i64: 64, 64>}]} {
    %c0 = arith.constant 0 : index
    %c0_0 = arith.constant 0 : index
    %0 = vector.load %arg2[%c0, %c0_0] : memref<64x16xbf16, #tpu.memory_space<vmem>>, vector<64x16xbf16>
    %c0_1 = arith.constant 0 : index
    %c0_2 = arith.constant 0 : index
    %1 = vector.load %arg3[%c0_1, %c0_2] : memref<64x16xbf16, #tpu.memory_space<vmem>>, vector<64x16xbf16>
    %cst = arith.constant dense<0.000000e+00> : vector<64x64xf32>
    %2 = tpu.matmul %0, %1, %cst {dimension_numbers = #tpu.dot_dimension_numbers<[1], [1], [0], [0], [0, 0, 1, 0], [], []>} : vector<64x16xbf16>, vector<64x16xbf16>, vector<64x64xf32> -> vector<64x64xf32>
    %3 = arith.negf %2 : vector<64x64xf32>
    %4 = math.exp %3 : vector<64x64xf32>
    %cst_3 = arith.constant 1.000000e+00 : f32
    %5 = vector.broadcast %cst_3 : f32 to vector<64x64xf32>
    %6 = arith.addf %5, %4 : vector<64x64xf32>
    %7 = arith.divf %5, %6 : vector<64x64xf32>
    %c0_4 = arith.constant 0 : index
    %c0_5 = arith.constant 0 : index
    %8 = vector.load %arg4[%c0_4, %c0_5] : memref<64x64xf32, #tpu.memory_space<vmem>>, vector<64x64xf32>
    tpu.vector_store %arg4[%c0_4, %c0_5], %7 {strides = array<i32>} : memref<64x64xf32, #tpu.memory_space<vmem>>, vector<64x64xf32>,
    return
  }
  func.func @transform_0(%arg0: i32, %arg1: i32) -> (i32, i32) {
    %c0_i32 = arith.constant 0 : i32
    %c0_i32_0 = arith.constant 0 : i32
    return %arg0, %c0_i32 : i32, i32
  }
  func.func @transform_1(%arg0: i32, %arg1: i32) -> (i32, i32) {
    %c0_i32 = arith.constant 0 : i32
    %c0_i32_0 = arith.constant 0 : i32
    return %arg1, %c0_i32 : i32, i32
  }
  func.func @transform_2(%arg0: i32, %arg1: i32) -> (i32, i32) {
    %c0_i32 = arith.constant 0 : i32
    return %arg0, %arg1 : i32, i32
  }
}

module attributes {stable_mosaic.version = 11 : i64} {
  func.func @_gcn_linear_kernel(%arg0: i32, %arg1: i32, %arg2: memref<64x64xbf16, #tpu.memory_space<vmem>>, %arg3: memref<64x32xbf16, #tpu.memory_space<vmem>>, %arg4: memref<32x16xf32, #tpu.memory_space<vmem>>, %arg5: memref<1x16xf32, #tpu.memory_space<vmem>>, %arg6: memref<16x16xf32, #tpu.memory_space<vmem>>, %arg7: memref<1x16xf32, #tpu.memory_space<vmem>>, %arg8: memref<64x16xbf16, #tpu.memory_space<vmem>>, %arg9: memref<64x16xbf16, #tpu.memory_space<vmem>>, %arg10: memref<64x16xf32, #tpu.memory_space<vmem>>) attributes {dimension_semantics = [#tpu.dimension_semantics<parallel>, #tpu.dimension_semantics<arbitrary>], iteration_bounds = array<i64: 1, 1>, scalar_prefetch = 0 : i64, scratch_operands = 1 : i64, tpu.core_type = #tpu.core_type<tc>, window_params = [{transform_indices = @transform_0, window_bounds = array<i64: 64, 64>}, {transform_indices = @transform_1, window_bounds = array<i64: 64, 32>}, {pipeline_mode = #tpu.pipeline_mode<synchronous>, transform_indices = @transform_2, window_bounds = array<i64: 32, 16>}, {pipeline_mode = #tpu.pipeline_mode<synchronous>, transform_indices = @transform_3, window_bounds = array<i64: 1, 16>}, {pipeline_mode = #tpu.pipeline_mode<synchronous>, transform_indices = @transform_4, window_bounds = array<i64: 16, 16>}, {pipeline_mode = #tpu.pipeline_mode<synchronous>, transform_indices = @transform_5, window_bounds = array<i64: 1, 16>}, {transform_indices = @transform_6, window_bounds = array<i64: 64, 16>}, {transform_indices = @transform_7, window_bounds = array<i64: 64, 16>}]} {
    %c0_i32 = arith.constant 0 : i32
    %0 = arith.cmpi eq, %arg1, %c0_i32 : i32
    %1 = arith.extui %0 : i1 to i32
    %c0_i32_0 = arith.constant 0 : i32
    %2 = arith.cmpi ne, %1, %c0_i32_0 : i32
    scf.if %2 {
      %cst_13 = arith.constant 0.000000e+00 : f32
      %15 = vector.broadcast %cst_13 : f32 to vector<64x16xf32>
      %c0_14 = arith.constant 0 : index
      %c0_15 = arith.constant 0 : index
      %16 = vector.load %arg10[%c0_14, %c0_15] : memref<64x16xf32, #tpu.memory_space<vmem>>, vector<64x16xf32>
      tpu.vector_store %arg10[%c0_14, %c0_15], %15 {strides = array<i32>} : memref<64x16xf32, #tpu.memory_space<vmem>>, vector<64x16xf32>,
    } else {
    }
    %c0 = arith.constant 0 : index
    %c0_1 = arith.constant 0 : index
    %3 = vector.load %arg3[%c0, %c0_1] : memref<64x32xbf16, #tpu.memory_space<vmem>>, vector<64x32xbf16>
    %c0_2 = arith.constant 0 : index
    %c0_3 = arith.constant 0 : index
    %4 = vector.load %arg4[%c0_2, %c0_3] : memref<32x16xf32, #tpu.memory_space<vmem>>, vector<32x16xf32>
    %cst = arith.constant dense<0.000000e+00> : vector<64x16xf32>
    %5 = tpu.matmul %3, %4, %cst {dimension_numbers = #tpu.dot_dimension_numbers<[1], [0], [0], [1], [0, 0, 1, 1], [], []>} : vector<64x32xbf16>, vector<32x16xf32>, vector<64x16xf32> -> vector<64x16xf32>
    %c0_4 = arith.constant 0 : index
    %c0_5 = arith.constant 0 : index
    %6 = vector.load %arg10[%c0_4, %c0_5] : memref<64x16xf32, #tpu.memory_space<vmem>>, vector<64x16xf32>
    %c0_6 = arith.constant 0 : index
    %c0_7 = arith.constant 0 : index
    %7 = vector.load %arg2[%c0_6, %c0_7] : memref<64x64xbf16, #tpu.memory_space<vmem>>, vector<64x64xbf16>
    %8 = arith.truncf %5 : vector<64x16xf32> to vector<64x16xbf16>
    %cst_8 = arith.constant dense<0.000000e+00> : vector<64x16xf32>
    %9 = tpu.matmul %7, %8, %cst_8 {dimension_numbers = #tpu.dot_dimension_numbers<[1], [0], [0], [1], [0, 0, 1, 1], [], []>} : vector<64x64xbf16>, vector<64x16xbf16>, vector<64x16xf32> -> vector<64x16xf32>
    %10 = arith.addf %6, %9 : vector<64x16xf32>
    %c0_9 = arith.constant 0 : index
    %c0_10 = arith.constant 0 : index
    %11 = vector.load %arg10[%c0_9, %c0_10] : memref<64x16xf32, #tpu.memory_space<vmem>>, vector<64x16xf32>
    tpu.vector_store %arg10[%c0_9, %c0_10], %10 {strides = array<i32>} : memref<64x16xf32, #tpu.memory_space<vmem>>, vector<64x16xf32>,
    %c0_i32_11 = arith.constant 0 : i32
    %12 = arith.cmpi eq, %arg1, %c0_i32_11 : i32
    %13 = arith.extui %12 : i1 to i32
    %c0_i32_12 = arith.constant 0 : i32
    %14 = arith.cmpi ne, %13, %c0_i32_12 : i32
    scf.if %14 {
      %c0_13 = arith.constant 0 : index
      %c0_14 = arith.constant 0 : index
      %15 = vector.load %arg10[%c0_13, %c0_14] : memref<64x16xf32, #tpu.memory_space<vmem>>, vector<64x16xf32>
      %c0_15 = arith.constant 0 : index
      %c0_16 = arith.constant 0 : index
      %16 = vector.load %arg5[%c0_15, %c0_16] : memref<1x16xf32, #tpu.memory_space<vmem>>, vector<1x16xf32>
      %17 = vector.broadcast %16 : vector<1x16xf32> to vector<64x16xf32>
      %18 = arith.addf %15, %17 : vector<64x16xf32>
      %c0_17 = arith.constant 0 : index
      %c0_18 = arith.constant 0 : index
      %19 = vector.load %arg6[%c0_17, %c0_18] : memref<16x16xf32, #tpu.memory_space<vmem>>, vector<16x16xf32>
      %cst_19 = arith.constant dense<0.000000e+00> : vector<64x16xf32>
      %20 = tpu.matmul %18, %19, %cst_19 {dimension_numbers = #tpu.dot_dimension_numbers<[1], [0], [0], [1], [0, 0, 1, 1], [], []>} : vector<64x16xf32>, vector<16x16xf32>, vector<64x16xf32> -> vector<64x16xf32>
      %c0_20 = arith.constant 0 : index
      %c0_21 = arith.constant 0 : index
      %21 = vector.load %arg7[%c0_20, %c0_21] : memref<1x16xf32, #tpu.memory_space<vmem>>, vector<1x16xf32>
      %22 = vector.broadcast %21 : vector<1x16xf32> to vector<64x16xf32>
      %23 = arith.addf %20, %22 : vector<64x16xf32>
      %24 = arith.truncf %18 : vector<64x16xf32> to vector<64x16xbf16>
      %c0_22 = arith.constant 0 : index
      %c0_23 = arith.constant 0 : index
      %25 = vector.load %arg8[%c0_22, %c0_23] : memref<64x16xbf16, #tpu.memory_space<vmem>>, vector<64x16xbf16>
      tpu.vector_store %arg8[%c0_22, %c0_23], %24 {strides = array<i32>} : memref<64x16xbf16, #tpu.memory_space<vmem>>, vector<64x16xbf16>,
      %26 = arith.truncf %23 : vector<64x16xf32> to vector<64x16xbf16>
      %c0_24 = arith.constant 0 : index
      %c0_25 = arith.constant 0 : index
      %27 = vector.load %arg9[%c0_24, %c0_25] : memref<64x16xbf16, #tpu.memory_space<vmem>>, vector<64x16xbf16>
      tpu.vector_store %arg9[%c0_24, %c0_25], %26 {strides = array<i32>} : memref<64x16xbf16, #tpu.memory_space<vmem>>, vector<64x16xbf16>,
    } else {
    }
    return
  }
  func.func @transform_0(%arg0: i32, %arg1: i32) -> (i32, i32) {
    %c0_i32 = arith.constant 0 : i32
    return %arg0, %arg1 : i32, i32
  }
  func.func @transform_1(%arg0: i32, %arg1: i32) -> (i32, i32) {
    %c0_i32 = arith.constant 0 : i32
    %c0_i32_0 = arith.constant 0 : i32
    return %arg1, %c0_i32 : i32, i32
  }
  func.func @transform_2(%arg0: i32, %arg1: i32) -> (i32, i32) {
    %c0_i32 = arith.constant 0 : i32
    %c0_i32_0 = arith.constant 0 : i32
    %c0_i32_1 = arith.constant 0 : i32
    return %c0_i32, %c0_i32_0 : i32, i32
  }
  func.func @transform_3(%arg0: i32, %arg1: i32) -> (i32, i32) {
    %c0_i32 = arith.constant 0 : i32
    %c0_i32_0 = arith.constant 0 : i32
    %c0_i32_1 = arith.constant 0 : i32
    return %c0_i32, %c0_i32_0 : i32, i32
  }
  func.func @transform_4(%arg0: i32, %arg1: i32) -> (i32, i32) {
    %c0_i32 = arith.constant 0 : i32
    %c0_i32_0 = arith.constant 0 : i32
    %c0_i32_1 = arith.constant 0 : i32
    return %c0_i32, %c0_i32_0 : i32, i32
  }
  func.func @transform_5(%arg0: i32, %arg1: i32) -> (i32, i32) {
    %c0_i32 = arith.constant 0 : i32
    %c0_i32_0 = arith.constant 0 : i32
    %c0_i32_1 = arith.constant 0 : i32
    return %c0_i32, %c0_i32_0 : i32, i32
  }
  func.func @transform_6(%arg0: i32, %arg1: i32) -> (i32, i32) {
    %c0_i32 = arith.constant 0 : i32
    %c0_i32_0 = arith.constant 0 : i32
    return %arg0, %c0_i32 : i32, i32
  }
  func.func @transform_7(%arg0: i32, %arg1: i32) -> (i32, i32) {
    %c0_i32 = arith.constant 0 : i32
    %c0_i32_0 = arith.constant 0 : i32
    return %arg0, %c0_i32 : i32, i32
  }
}

</mosaic_0001>

<llo_original>
// kernel: lp_generator_forward.5
$region0: #{lp_generator_forward.5}
  #allocation0 [shape = 'u32[]', space=smem, size = 0x4, offset = 0x4, fixed_abs, tag = 'smem constant byte address 0x4 - core index']
  #allocation1 [shape = 'u32[144,128]{1,0:T(1,128)}', space=vmem, size = 0x12000, scoped, tag = 'internal scratch']
  %s0 = inlined_call_operand.vmem [shape: bf16[64,16], index: 0, kind: input, shape index: {}]
  %s1 = inlined_call_operand.vmem [shape: bf16[64,16], index: 1, kind: input, shape index: {}]
  %s2 = inlined_call_operand.hbm [shape: f32[64,64], index: 2, kind: output, shape index: {}]
  %s3 = sld [smem:[#allocation0]]
  $region18: #{lp_generator_forward.5} parent=0
    _
  %s5 = ssub.s32 1, %s3
  %s6 = scalar_select 0, %s5, %s3
  $region1: #{lp_generator_forward.5} parent=0
    #allocation2 [shape = 'u8[32768]{0}', space=vmem, size = 0x8000, scoped, tag = 'output window, operand 0, single buffered']
    #allocation3 [shape = 's32[1]{0}', space=sflag, size = 0x4, scoped, tag = 'scoped memory for lp_generator_forward.5']
    %7 = vsyncpa [#allocation3], 0
    // Predicated region
    $region2: #{lp_generator_forward.5} parent=1 // pred_check
      _
    $region3: #{lp_generator_forward.5} parent=1 // pred_check_branch
      %9 = sbr.rel (0) target = $region5
    $region4: #{lp_generator_forward.5} parent=1 // pred_region
      _
    $region5: #{lp_generator_forward.5} parent=1 // pred_fallthru
      _
    // Predicated region
    $region6: #{lp_generator_forward.5} parent=1 // pred_check
      _
    $region7: #{lp_generator_forward.5} parent=1 // pred_check_branch
      %11 = sbr.rel (0) target = $region9
    $region8: #{lp_generator_forward.5} parent=1 // pred_region
      _
    $region9: #{lp_generator_forward.5} parent=1 // pred_fallthru
      _
    %v13 = vld [vmem:[%s0] sm:$0xf]
    %v14 = vld [vmem:[%s0 + $0x4] sm:$0xf]
    %v15 = vld [vmem:[%s0 + $0x8] sm:$0xf]
    %v16 = vld [vmem:[%s0 + $0xc] sm:$0xf]
    %v17 = vld [vmem:[%s0 + $0x10] sm:$0xf]
    %v18 = vld [vmem:[%s0 + $0x14] sm:$0xf]
    %v19 = vld [vmem:[%s0 + $0x18] sm:$0xf]
    %v20 = vld [vmem:[%s0 + $0x1c] sm:$0xf]
    %v21 = vld [vmem:[%s1] sm:$0xf]
    %v22 = vld [vmem:[%s1 + $0x4] sm:$0xf]
    %v23 = vld [vmem:[%s1 + $0x8] sm:$0xf]
    %v24 = vld [vmem:[%s1 + $0xc] sm:$0xf]
    %v25 = vld [vmem:[%s1 + $0x10] sm:$0xf]
    %v26 = vld [vmem:[%s1 + $0x14] sm:$0xf]
    %v27 = vld [vmem:[%s1 + $0x18] sm:$0xf]
    %v28 = vld [vmem:[%s1 + $0x1c] sm:$0xf]
    %v37 = vunpack.c.l.b16 %v13
    %v38 = vunpack.c.l.b16 %v14
    %v39 = vunpack.c.l.b16 %v15
    %v40 = vunpack.c.l.b16 %v16
    %v41 = vunpack.c.l.b16 %v17
    %v42 = vunpack.c.l.b16 %v18
    %v43 = vunpack.c.l.b16 %v19
    %v44 = vunpack.c.l.b16 %v20
    %v45 = vpack.c.b16 %v38, %v37
    %v46 = vpack.c.b16 %v40, %v39
    %v47 = vpack.c.b16 %v42, %v41
    %v48 = vpack.c.b16 %v44, %v43
    %v57 = vunpack.c.l.b16 %v21
    %v58 = vunpack.c.l.b16 %v22
    %v59 = vunpack.c.l.b16 %v23
    %v60 = vunpack.c.l.b16 %v24
    %v61 = vunpack.c.l.b16 %v25
    %v62 = vunpack.c.l.b16 %v26
    %v63 = vunpack.c.l.b16 %v27
    %v64 = vunpack.c.l.b16 %v28
    %v65 = vpack.c.b16 %v58, %v57
    %v66 = vpack.c.b16 %v60, %v59
    %v67 = vpack.c.b16 %v62, %v61
    %v68 = vpack.c.b16 %v64, %v63
    %vm69 = vcmask 130048
    %v71 = vsel %vm69, %v45, 0
    %v74 = vsel %vm69, %v46, 0
    %v77 = vsel %vm69, %v47, 0
    %v80 = vsel %vm69, %v48, 0
    %v83 = vsel %vm69, %v65, 0
    %v86 = vsel %vm69, %v66, 0
    %v89 = vsel %vm69, %v67, 0
    %v92 = vsel %vm69, %v68, 0
    %94 = vmatprep.subr.bf16.mxu0 0
    %95 = vmatpush1.bf16.xpose.msra.mxu0 0
    %96 = vmatprep.subr.bf16.mxu0 0
    %97 = vmatpush1.bf16.xpose.msra.mxu0 0
    %98 = vmatprep.subr.bf16.mxu0 0
    %99 = vmatpush1.bf16.xpose.msra.mxu0 0
    %100 = vmatprep.subr.bf16.mxu0 0
    %101 = vmatpush1.bf16.xpose.msra.mxu0 0
    %102 = vmatprep.subr.bf16.mxu0 0
    %103 = vmatpush1.bf16.xpose.msra.mxu0 %v92
    %104 = vmatprep.subr.bf16.mxu0 0
    %105 = vmatpush1.bf16.xpose.msra.mxu0 %v89
    %106 = vmatprep.subr.bf16.mxu0 0
    %107 = vmatpush1.bf16.xpose.msra.mxu0 %v86
    %108 = vmatprep.subr.bf16.mxu0 0
    %109 = vmatpush1.bf16.xpose.msra.mxu0 %v83
    %110 = vmatprep.subr.bf16.mxu0 0
    %111 = vmatpush2.bf16.xpose.msra.mxu0 0
    %112 = vmatprep.subr.bf16.mxu0 0
    %113 = vmatpush2.bf16.xpose.msra.mxu0 0
    %114 = vmatprep.subr.bf16.mxu0 0
    %115 = vmatpush2.bf16.xpose.msra.mxu0 0
    %116 = vmatprep.subr.bf16.mxu0 0
    %117 = vmatpush2.bf16.xpose.msra.mxu0 0
    %118 = vmatprep.subr.bf16.mxu0 0
    %119 = vmatpush2.bf16.xpose.msra.mxu0 0
    %120 = vmatprep.subr.bf16.mxu0 0
    %121 = vmatpush2.bf16.xpose.msra.mxu0 0
    %122 = vmatprep.subr.bf16.mxu0 0
    %123 = vmatpush2.bf16.xpose.msra.mxu0 0
    %124 = vmatprep.subr.bf16.mxu0 0
    %125 = vmatpush2.bf16.xpose.msra.mxu0 0
    %126 = vmatprep.mubr.bf16.mxu0 0
    %127 = vmatmul.mubr.bf16.gmra.mxu0 %v71
    %v128 = vpop.f32.mrf.mxu0
    %v129 = vadd.f32 0.0, %v128
    %v130 = vpop.f32.mrf.mxu0
    %v131 = vpop.f32.mrf.mxu0
    %v132 = vadd.f32 0.0, %v131
    %v133 = vpop.f32.mrf.mxu0
    %134 = vmatprep.mubr.bf16.mxu0 0
    %135 = vmatmul.mubr.bf16.gmra.mxu0 %v74
    %v136 = vpop.f32.mrf.mxu0
    %v137 = vadd.f32 0.0, %v136
    %v138 = vpop.f32.mrf.mxu0
    %v139 = vpop.f32.mrf.mxu0
    %v140 = vadd.f32 0.0, %v139
    %v141 = vpop.f32.mrf.mxu0
    %142 = vmatprep.mubr.bf16.mxu0 0
    %143 = vmatmul.mubr.bf16.gmra.mxu0 %v77
    %v144 = vpop.f32.mrf.mxu0
    %v145 = vadd.f32 0.0, %v144
    %v146 = vpop.f32.mrf.mxu0
    %v147 = vpop.f32.mrf.mxu0
    %v148 = vadd.f32 0.0, %v147
    %v149 = vpop.f32.mrf.mxu0
    %150 = vmatprep.mubr.bf16.mxu0 0
    %151 = vmatmul.mubr.bf16.gmra.mxu0 %v80
    %v152 = vpop.f32.mrf.mxu0
    %v153 = vadd.f32 0.0, %v152
    %v154 = vpop.f32.mrf.mxu0
    %v155 = vpop.f32.mrf.mxu0
    %v156 = vadd.f32 0.0, %v155
    %v157 = vpop.f32.mrf.mxu0
    %158 = vdwg.mxu0
    %v159 = vxor.u32 %v129, 2147483648
    %v160 = vxor.u32 %v132, 2147483648
    %v161 = vxor.u32 %v137, 2147483648
    %v162 = vxor.u32 %v140, 2147483648
    %v163 = vxor.u32 %v145, 2147483648
    %v164 = vxor.u32 %v148, 2147483648
    %v165 = vxor.u32 %v153, 2147483648
    %v166 = vxor.u32 %v156, 2147483648
    %v167 = vmul.f32 %v159, 1.442695
    %v168 = vpow.pop %v167
    %v169 = vmul.f32 %v160, 1.442695
    %v170 = vpow.pop %v169
    %v171 = vmul.f32 %v161, 1.442695
    %v172 = vpow.pop %v171
    %v173 = vmul.f32 %v162, 1.442695
    %v174 = vpow.pop %v173
    %v175 = vmul.f32 %v163, 1.442695
    %v176 = vpow.pop %v175
    %v177 = vmul.f32 %v164, 1.442695
    %v178 = vpow.pop %v177
    %v179 = vmul.f32 %v165, 1.442695
    %v180 = vpow.pop %v179
    %v181 = vmul.f32 %v166, 1.442695
    %v182 = vpow.pop %v181
    %v183 = vadd.f32 %v168, 1.0
    %v184 = vadd.f32 %v170, 1.0
    %v185 = vadd.f32 %v172, 1.0
    %v186 = vadd.f32 %v174, 1.0
    %v187 = vadd.f32 %v176, 1.0
    %v188 = vadd.f32 %v178, 1.0
    %v189 = vadd.f32 %v180, 1.0
    %v190 = vadd.f32 %v182, 1.0
    %v191 = vrcp.pop %v183
    %v192 = vmul.f32 1.0, %v191
    %v193 = vrcp.pop %v184
    %v194 = vmul.f32 1.0, %v193
    %v195 = vrcp.pop %v185
    %v196 = vmul.f32 1.0, %v195
    %v197 = vrcp.pop %v186
    %v198 = vmul.f32 1.0, %v197
    %v199 = vrcp.pop %v187
    %v200 = vmul.f32 1.0, %v199
    %v201 = vrcp.pop %v188
    %v202 = vmul.f32 1.0, %v201
    %v203 = vrcp.pop %v189
    %v204 = vmul.f32 1.0, %v203
    %v205 = vrcp.pop %v190
    %v206 = vmul.f32 1.0, %v205
    %vm207 = vcmask 523264
    %208 = vst.msk [vmem:[#allocation2] sm:$0xff] %vm207, %v192
    %209 = vst.msk [vmem:[#allocation2 + $0x8] sm:$0xff] %vm207, %v194
    %210 = vst.msk [vmem:[#allocation2 + $0x10] sm:$0xff] %vm207, %v196
    %211 = vst.msk [vmem:[#allocation2 + $0x18] sm:$0xff] %vm207, %v198
    %212 = vst.msk [vmem:[#allocation2 + $0x20] sm:$0xff] %vm207, %v200
    %213 = vst.msk [vmem:[#allocation2 + $0x28] sm:$0xff] %vm207, %v202
    %214 = vst.msk [vmem:[#allocation2 + $0x30] sm:$0xff] %vm207, %v204
    %215 = vst.msk [vmem:[#allocation2 + $0x38] sm:$0xff] %vm207, %v206
    // Predicated region
    $region10: #{lp_generator_forward.5} parent=1 // pred_check
      _
    $region11: #{lp_generator_forward.5} parent=1 // pred_check_branch
      %217 = sbr.rel (0) target = $region13
    $region12: #{lp_generator_forward.5} parent=1 // pred_region
      %s219 = ssub.s32 1024, 1024
      %220 = vsyncadd [#allocation3], %s219
      %s221 = sshll.u32 [#allocation2], 4
      %s222 = int_to_ptr.vmem [resolvable:$true] %s221
      %227 = dma.vmem_to_hbm [thread:$0]  %s222, 1024, %s2, [#allocation3], 128, 128, 8
    $region13: #{lp_generator_forward.5} parent=1 // pred_fallthru
      _
    // Predicated region
    $region14: #{lp_generator_forward.5} parent=1 // pred_check
      _
    $region15: #{lp_generator_forward.5} parent=1 // pred_check_branch
      %229 = sbr.rel (0) target = $region17
    $region16: #{lp_generator_forward.5} parent=1 // pred_region
      %230 = dma.done [#allocation3], 1024
    $region17: #{lp_generator_forward.5} parent=1 // pred_fallthru
      _
    %231 = vsyncpa [#allocation3], 1

// kernel: lp_generator_forward.3
$region0: #{lp_generator_forward.3}
  #allocation0 [shape = 'u32[]', space=smem, size = 0x4, offset = 0x4, fixed_abs, tag = 'smem constant byte address 0x4 - core index']
  #allocation1 [shape = 'u32[144,128]{1,0:T(1,128)}', space=vmem, size = 0x12000, scoped, tag = 'internal scratch']
  #allocation2 [shape = 'f32[64,32]{1,0:T(8,128)}', space=vmem, size = 0x8000, scoped, tag = 'scratch operand']
  %s0 = inlined_call_operand.vmem [shape: bf16[64,64], index: 0, kind: input, shape index: {}]
  %s1 = inlined_call_operand.vmem [shape: f32[64,16], index: 1, kind: input, shape index: {}]
  %s2 = inlined_call_operand.vmem [shape: f32[16,32], index: 2, kind: input, shape index: {}]
  %s3 = inlined_call_operand.vmem [shape: f32[1,32], index: 3, kind: input, shape index: {}]
  %s4 = inlined_call_operand.vmem [shape: bf16[64,32], index: 4, kind: output, shape index: {}]
  %s5 = sld [smem:[#allocation0]]
  $region34: #{lp_generator_forward.3} parent=0
    _
  %s7 = ssub.s32 1, %s5
  %s8 = scalar_select 0, %s7, %s5
  // Predicated region
  $region2: #{lp_generator_forward.3} parent=0 // pred_check
    _
  $region3: #{lp_generator_forward.3} parent=0 // pred_check_branch
    %10 = sbr.rel (0) target = $region5
  $region4: #{lp_generator_forward.3} parent=0 // pred_region
    _
  $region5: #{lp_generator_forward.3} parent=0 // pred_fallthru
    _
  // Predicated region
  $region6: #{lp_generator_forward.3} parent=0 // pred_check
    _
  $region7: #{lp_generator_forward.3} parent=0 // pred_check_branch
    %12 = sbr.rel (0) target = $region9
  $region8: #{lp_generator_forward.3} parent=0 // pred_region
    _
  $region9: #{lp_generator_forward.3} parent=0 // pred_fallthru
    _
  // Predicated region
  $region10: #{lp_generator_forward.3} parent=0 // pred_check
    _
  $region11: #{lp_generator_forward.3} parent=0 // pred_check_branch
    %14 = sbr.rel (0) target = $region13
  $region12: #{lp_generator_forward.3} parent=0 // pred_region
    _
  $region13: #{lp_generator_forward.3} parent=0 // pred_fallthru
    _
  // Predicated region
  $region14: #{lp_generator_forward.3} parent=0 // pred_check
    _
  $region15: #{lp_generator_forward.3} parent=0 // pred_check_branch
    %16 = sbr.rel (0) target = $region17
  $region16: #{lp_generator_forward.3} parent=0 // pred_region
    _
  $region17: #{lp_generator_forward.3} parent=0 // pred_fallthru
    _
  %p18 = scmp.eq.s32.totalorder 0, 0
  // Predicated region
  $region18: #{lp_generator_forward.3} parent=0 // pred_check
    %p19 = pneg %p18
  $region19: #{lp_generator_forward.3} parent=0 // pred_check_branch
    %21 = sbr.rel (%p19) target = $region21
  $region20: #{lp_generator_forward.3} parent=0 // pred_region
    %vm22 = vcmask 261120
    %23 = vst.msk [vmem:[#allocation2] sm:$0xff] %vm22, 0.0
    %24 = vst.msk [vmem:[#allocation2 + $0x8] sm:$0xff] %vm22, 0.0
    %25 = vst.msk [vmem:[#allocation2 + $0x10] sm:$0xff] %vm22, 0.0
    %26 = vst.msk [vmem:[#allocation2 + $0x18] sm:$0xff] %vm22, 0.0
    %27 = vst.msk [vmem:[#allocation2 + $0x20] sm:$0xff] %vm22, 0.0
    %28 = vst.msk [vmem:[#allocation2 + $0x28] sm:$0xff] %vm22, 0.0
    %29 = vst.msk [vmem:[#allocation2 + $0x30] sm:$0xff] %vm22, 0.0
    %30 = vst.msk [vmem:[#allocation2 + $0x38] sm:$0xff] %vm22, 0.0
  $region21: #{lp_generator_forward.3} parent=0 // pred_fallthru
    _
  %v31 = vld [vmem:[%s1] sm:$0xff]
  %v32 = vld [vmem:[%s1 + $0x8] sm:$0xff]
  %v33 = vld [vmem:[%s1 + $0x10] sm:$0xff]
  %v34 = vld [vmem:[%s1 + $0x18] sm:$0xff]
  %v35 = vld [vmem:[%s1 + $0x20] sm:$0xff]
  %v36 = vld [vmem:[%s1 + $0x28] sm:$0xff]
  %v37 = vld [vmem:[%s1 + $0x30] sm:$0xff]
  %v38 = vld [vmem:[%s1 + $0x38] sm:$0xff]
  %v39 = vld [vmem:[%s2] sm:$0xff]
  %v40 = vld [vmem:[%s2 + $0x8] sm:$0xff]
  %vm41 = vcmask 130048
  %v43 = vsel %vm41, %v31, 0
  %v46 = vsel %vm41, %v32, 0
  %v49 = vsel %vm41, %v33, 0
  %v52 = vsel %vm41, %v34, 0
  %v55 = vsel %vm41, %v35, 0
  %v58 = vsel %vm41, %v36, 0
  %v61 = vsel %vm41, %v37, 0
  %v64 = vsel %vm41, %v38, 0
  %66 = vmatprep.subr.mxu0 0.0
  %67 = vmatpush1.msra.mxu0 0.0
  %68 = vmatprep.subr.mxu0 0.0
  %69 = vmatpush1.msra.mxu0 0.0
  %70 = vmatprep.subr.mxu0 0.0
  %71 = vmatpush1.msra.mxu0 0.0
  %72 = vmatprep.subr.mxu0 0.0
  %73 = vmatpush1.msra.mxu0 0.0
  %74 = vmatprep.subr.mxu0 0.0
  %75 = vmatpush1.msra.mxu0 0.0
  %76 = vmatprep.subr.mxu0 0.0
  %77 = vmatpush1.msra.mxu0 0.0
  %78 = vmatprep.subr.mxu0 0.0
  %79 = vmatpush1.msra.mxu0 0.0
  %80 = vmatprep.subr.mxu0 0.0
  %81 = vmatpush1.msra.mxu0 0.0
  %82 = vmatprep.subr.mxu0 0.0
  %83 = vmatpush1.msra.mxu0 0.0
  %84 = vmatprep.subr.mxu0 0.0
  %85 = vmatpush1.msra.mxu0 0.0
  %86 = vmatprep.subr.mxu0 0.0
  %87 = vmatpush1.msra.mxu0 0.0
  %88 = vmatprep.subr.mxu0 0.0
  %89 = vmatpush1.msra.mxu0 0.0
  %90 = vmatprep.subr.mxu0 0.0
  %91 = vmatpush1.msra.mxu0 0.0
  %92 = vmatprep.subr.mxu0 0.0
  %93 = vmatpush1.msra.mxu0 0.0
  %94 = vmatprep.subr.mxu0 0.0
  %95 = vmatpush1.msra.mxu0 %v40
  %96 = vmatprep.subr.mxu0 0.0
  %97 = vmatpush1.msra.mxu0 %v39
  %98 = vmatprep.subr.mxu0 0.0
  %99 = vmatpush2.msra.mxu0 0.0
  %100 = vmatprep.subr.mxu0 0.0
  %101 = vmatpush2.msra.mxu0 0.0
  %102 = vmatprep.subr.mxu0 0.0
  %103 = vmatpush2.msra.mxu0 0.0
  %104 = vmatprep.subr.mxu0 0.0
  %105 = vmatpush2.msra.mxu0 0.0
  %106 = vmatprep.subr.mxu0 0.0
  %107 = vmatpush2.msra.mxu0 0.0
  %108 = vmatprep.subr.mxu0 0.0
  %109 = vmatpush2.msra.mxu0 0.0
  %110 = vmatprep.subr.mxu0 0.0
  %111 = vmatpush2.msra.mxu0 0.0
  %112 = vmatprep.subr.mxu0 0.0
  %113 = vmatpush2.msra.mxu0 0.0
  %114 = vmatprep.subr.mxu0 0.0
  %115 = vmatpush2.msra.mxu0 0.0
  %116 = vmatprep.subr.mxu0 0.0
  %117 = vmatpush2.msra.mxu0 0.0
  %118 = vmatprep.subr.mxu0 0.0
  %119 = vmatpush2.msra.mxu0 0.0
  %120 = vmatprep.subr.mxu0 0.0
  %121 = vmatpush2.msra.mxu0 0.0
  %122 = vmatprep.subr.mxu0 0.0
  %123 = vmatpush2.msra.mxu0 0.0
  %124 = vmatprep.subr.mxu0 0.0
  %125 = vmatpush2.msra.mxu0 0.0
  %126 = vmatprep.subr.mxu0 0.0
  %127 = vmatpush2.msra.mxu0 0.0
  %128 = vmatprep.subr.mxu0 0.0
  %129 = vmatpush2.msra.mxu0 0.0
  %130 = vmatprep.mubr.f32.mxu0 0.0
  %131 = vmatmul.mubr.f32.gmra.mxu0 %v43
  %v132 = vpop.f32.mrf.mxu0
  %v133 = vadd.f32 0.0, %v132
  %v134 = vpop.f32.mrf.mxu0
  %135 = vmatprep.mubr.f32.mxu0 0.0
  %136 = vmatmul.mubr.f32.gmra.mxu0 %v46
  %v137 = vpop.f32.mrf.mxu0
  %v138 = vadd.f32 0.0, %v137
  %v139 = vpop.f32.mrf.mxu0
  %140 = vmatprep.mubr.f32.mxu0 0.0
  %141 = vmatmul.mubr.f32.gmra.mxu0 %v49
  %v142 = vpop.f32.mrf.mxu0
  %v143 = vadd.f32 0.0, %v142
  %v144 = vpop.f32.mrf.mxu0
  %145 = vmatprep.mubr.f32.mxu0 0.0
  %146 = vmatmul.mubr.f32.gmra.mxu0 %v52
  %v147 = vpop.f32.mrf.mxu0
  %v148 = vadd.f32 0.0, %v147
  %v149 = vpop.f32.mrf.mxu0
  %150 = vmatprep.mubr.f32.mxu0 0.0
  %151 = vmatmul.mubr.f32.gmra.mxu0 %v55
  %v152 = vpop.f32.mrf.mxu0
  %v153 = vadd.f32 0.0, %v152
  %v154 = vpop.f32.mrf.mxu0
  %155 = vmatprep.mubr.f32.mxu0 0.0
  %156 = vmatmul.mubr.f32.gmra.mxu0 %v58
  %v157 = vpop.f32.mrf.mxu0
  %v158 = vadd.f32 0.0, %v157
  %v159 = vpop.f32.mrf.mxu0
  %160 = vmatprep.mubr.f32.mxu0 0.0
  %161 = vmatmul.mubr.f32.gmra.mxu0 %v61
  %v162 = vpop.f32.mrf.mxu0
  %v163 = vadd.f32 0.0, %v162
  %v164 = vpop.f32.mrf.mxu0
  %165 = vmatprep.mubr.f32.mxu0 0.0
  %166 = vmatmul.mubr.f32.gmra.mxu0 %v64
  %v167 = vpop.f32.mrf.mxu0
  %v168 = vadd.f32 0.0, %v167
  %v169 = vpop.f32.mrf.mxu0
  %170 = vdwg.mxu0
  %v171 = vld [vmem:[#allocation2] sm:$0xff]
  %v172 = vld [vmem:[#allocation2 + $0x8] sm:$0xff]
  %v173 = vld [vmem:[#allocation2 + $0x10] sm:$0xff]
  %v174 = vld [vmem:[#allocation2 + $0x18] sm:$0xff]
  %v175 = vld [vmem:[#allocation2 + $0x20] sm:$0xff]
  %v176 = vld [vmem:[#allocation2 + $0x28] sm:$0xff]
  %v177 = vld [vmem:[#allocation2 + $0x30] sm:$0xff]
  %v178 = vld [vmem:[#allocation2 + $0x38] sm:$0xff]
  %v179 = vld [vmem:[%s0] sm:$0xf]
  %v180 = vld [vmem:[%s0 + $0x4] sm:$0xf]
  %v181 = vld [vmem:[%s0 + $0x8] sm:$0xf]
  %v182 = vld [vmem:[%s0 + $0xc] sm:$0xf]
  %v183 = vld [vmem:[%s0 + $0x10] sm:$0xf]
  %v184 = vld [vmem:[%s0 + $0x14] sm:$0xf]
  %v185 = vld [vmem:[%s0 + $0x18] sm:$0xf]
  %v186 = vld [vmem:[%s0 + $0x1c] sm:$0xf]
  %v187 = vpack.c.bf16 %v138, %v133
  %v188 = vpack.c.bf16 %v148, %v143
  %v189 = vpack.c.bf16 %v158, %v153
  %v190 = vpack.c.bf16 %v168, %v163
  %v199 = vunpack.c.l.b16 %v179
  %v200 = vunpack.c.l.b16 %v180
  %v201 = vunpack.c.l.b16 %v181
  %v202 = vunpack.c.l.b16 %v182
  %v203 = vunpack.c.l.b16 %v183
  %v204 = vunpack.c.l.b16 %v184
  %v205 = vunpack.c.l.b16 %v185
  %v206 = vunpack.c.l.b16 %v186
  %v207 = vpack.c.b16 %v200, %v199
  %v208 = vpack.c.b16 %v202, %v201
  %v209 = vpack.c.b16 %v204, %v203
  %v210 = vpack.c.b16 %v206, %v205
  %vm211 = vcmask 523264
  %v213 = vsel %vm211, %v207, 0
  %v216 = vsel %vm211, %v208, 0
  %v219 = vsel %vm211, %v209, 0
  %v222 = vsel %vm211, %v210, 0
  %224 = vmatprep.subr.bf16.mxu0 0
  %225 = vmatpush1.bf16.msra.mxu0 0
  %226 = vmatprep.subr.bf16.mxu0 0
  %227 = vmatpush1.bf16.msra.mxu0 0
  %228 = vmatprep.subr.bf16.mxu0 0
  %229 = vmatpush1.bf16.msra.mxu0 0
  %230 = vmatprep.subr.bf16.mxu0 0
  %231 = vmatpush1.bf16.msra.mxu0 0
  %232 = vmatprep.subr.bf16.mxu0 0
  %233 = vmatpush1.bf16.msra.mxu0 %v190
  %234 = vmatprep.subr.bf16.mxu0 0
  %235 = vmatpush1.bf16.msra.mxu0 %v189
  %236 = vmatprep.subr.bf16.mxu0 0
  %237 = vmatpush1.bf16.msra.mxu0 %v188
  %238 = vmatprep.subr.bf16.mxu0 0
  %239 = vmatpush1.bf16.msra.mxu0 %v187
  %240 = vmatprep.subr.bf16.mxu0 0
  %241 = vmatpush2.bf16.msra.mxu0 0
  %242 = vmatprep.subr.bf16.mxu0 0
  %243 = vmatpush2.bf16.msra.mxu0 0
  %244 = vmatprep.subr.bf16.mxu0 0
  %245 = vmatpush2.bf16.msra.mxu0 0
  %246 = vmatprep.subr.bf16.mxu0 0
  %247 = vmatpush2.bf16.msra.mxu0 0
  %248 = vmatprep.subr.bf16.mxu0 0
  %249 = vmatpush2.bf16.msra.mxu0 0
  %250 = vmatprep.subr.bf16.mxu0 0
  %251 = vmatpush2.bf16.msra.mxu0 0
  %252 = vmatprep.subr.bf16.mxu0 0
  %253 = vmatpush2.bf16.msra.mxu0 0
  %254 = vmatprep.subr.bf16.mxu0 0
  %255 = vmatpush2.bf16.msra.mxu0 0
  %256 = vmatprep.mubr.bf16.mxu0 0
  %257 = vmatmul.mubr.bf16.gmra.mxu0 %v213
  %v258 = vpop.f32.mrf.mxu0
  %v259 = vadd.f32 0.0, %v258
  %v260 = vpop.f32.mrf.mxu0
  %v261 = vpop.f32.mrf.mxu0
  %v262 = vadd.f32 0.0, %v261
  %v263 = vpop.f32.mrf.mxu0
  %264 = vmatprep.mubr.bf16.mxu0 0
  %265 = vmatmul.mubr.bf16.gmra.mxu0 %v216
  %v266 = vpop.f32.mrf.mxu0
  %v267 = vadd.f32 0.0, %v266
  %v268 = vpop.f32.mrf.mxu0
  %v269 = vpop.f32.mrf.mxu0
  %v270 = vadd.f32 0.0, %v269
  %v271 = vpop.f32.mrf.mxu0
  %272 = vmatprep.mubr.bf16.mxu0 0
  %273 = vmatmul.mubr.bf16.gmra.mxu0 %v219
  %v274 = vpop.f32.mrf.mxu0
  %v275 = vadd.f32 0.0, %v274
  %v276 = vpop.f32.mrf.mxu0
  %v277 = vpop.f32.mrf.mxu0
  %v278 = vadd.f32 0.0, %v277
  %v279 = vpop.f32.mrf.mxu0
  %280 = vmatprep.mubr.bf16.mxu0 0
  %281 = vmatmul.mubr.bf16.gmra.mxu0 %v222
  %v282 = vpop.f32.mrf.mxu0
  %v283 = vadd.f32 0.0, %v282
  %v284 = vpop.f32.mrf.mxu0
  %v285 = vpop.f32.mrf.mxu0
  %v286 = vadd.f32 0.0, %v285
  %v287 = vpop.f32.mrf.mxu0
  %288 = vdwg.mxu0
  %v289 = vadd.f32 %v171, %v259
  %v290 = vadd.f32 %v172, %v262
  %v291 = vadd.f32 %v173, %v267
  %v292 = vadd.f32 %v174, %v270
  %v293 = vadd.f32 %v175, %v275
  %v294 = vadd.f32 %v176, %v278
  %v295 = vadd.f32 %v177, %v283
  %v296 = vadd.f32 %v178, %v286
  %vm297 = vcmask 261120
  %298 = vst.msk [vmem:[#allocation2] sm:$0xff] %vm297, %v289
  %299 = vst.msk [vmem:[#allocation2 + $0x8] sm:$0xff] %vm297, %v290
  %300 = vst.msk [vmem:[#allocation2 + $0x10] sm:$0xff] %vm297, %v291
  %301 = vst.msk [vmem:[#allocation2 + $0x18] sm:$0xff] %vm297, %v292
  %302 = vst.msk [vmem:[#allocation2 + $0x20] sm:$0xff] %vm297, %v293
  %303 = vst.msk [vmem:[#allocation2 + $0x28] sm:$0xff] %vm297, %v294
  %304 = vst.msk [vmem:[#allocation2 + $0x30] sm:$0xff] %vm297, %v295
  %305 = vst.msk [vmem:[#allocation2 + $0x38] sm:$0xff] %vm297, %v296
  // Predicated region
  $region22: #{lp_generator_forward.3} parent=0 // pred_check
    %p306 = pneg %p18
  $region23: #{lp_generator_forward.3} parent=0 // pred_check_branch
    %308 = sbr.rel (%p306) target = $region25
  $region24: #{lp_generator_forward.3} parent=0 // pred_region
    %v309 = vld [vmem:[#allocation2] sm:$0xff]
    %v310 = vld [vmem:[#allocation2 + $0x8] sm:$0xff]
    %v311 = vld [vmem:[#allocation2 + $0x10] sm:$0xff]
    %v312 = vld [vmem:[#allocation2 + $0x18] sm:$0xff]
    %v313 = vld [vmem:[#allocation2 + $0x20] sm:$0xff]
    %v314 = vld [vmem:[#allocation2 + $0x28] sm:$0xff]
    %v315 = vld [vmem:[#allocation2 + $0x30] sm:$0xff]
    %v316 = vld [vmem:[#allocation2 + $0x38] sm:$0xff]
    %v317 = vld [vmem:[%s3] sm:$0x1]
    %v319 = vlaneseq
    %v320 = vshrl.u32 %v319, 7
    %v321 = vsub.s32 0, %v320
    %v322 = vrot.slane %v317, %v321
    %v324 = vadd.f32 %v309, %v322
    %v325 = vadd.f32 %v310, %v322
    %v326 = vadd.f32 %v311, %v322
    %v327 = vadd.f32 %v312, %v322
    %v328 = vadd.f32 %v313, %v322
    %v329 = vadd.f32 %v314, %v322
    %v330 = vadd.f32 %v315, %v322
    %v331 = vadd.f32 %v316, %v322
    %v332 = vmax.f32 %v324, 0.0
    %v333 = vmax.f32 %v325, 0.0
    %v334 = vmax.f32 %v326, 0.0
    %v335 = vmax.f32 %v327, 0.0
    %v336 = vmax.f32 %v328, 0.0
    %v337 = vmax.f32 %v329, 0.0
    %v338 = vmax.f32 %v330, 0.0
    %v339 = vmax.f32 %v331, 0.0
    %v340 = vpack.c.bf16 %v333, %v332
    %v341 = vpack.c.bf16 %v335, %v334
    %v342 = vpack.c.bf16 %v337, %v336
    %v343 = vpack.c.bf16 %v339, %v338
    %v348 = vunpack.c.l.b16 %v340
    %v349 = vunpack.c.h.b16 %v340
    %v350 = vunpack.c.l.b16 %v341
    %v351 = vunpack.c.h.b16 %v341
    %v352 = vunpack.c.l.b16 %v342
    %v353 = vunpack.c.h.b16 %v342
    %v354 = vunpack.c.l.b16 %v343
    %v355 = vunpack.c.h.b16 %v343
    %v356 = vpack.c.b16 %v348, %v348
    %v357 = vpack.c.b16 %v349, %v349
    %v358 = vpack.c.b16 %v350, %v350
    %v359 = vpack.c.b16 %v351, %v351
    %v360 = vpack.c.b16 %v352, %v352
    %v361 = vpack.c.b16 %v353, %v353
    %v362 = vpack.c.b16 %v354, %v354
    %v363 = vpack.c.b16 %v355, %v355
    %vm372 = vcmask 257024
    %373 = vst.msk [vmem:[%s4] sm:$0xf] %vm372, %v356
    %374 = vst.msk [vmem:[%s4 + $0x4] sm:$0xf] %vm372, %v357
    %375 = vst.msk [vmem:[%s4 + $0x8] sm:$0xf] %vm372, %v358
    %376 = vst.msk [vmem:[%s4 + $0xc] sm:$0xf] %vm372, %v359
    %377 = vst.msk [vmem:[%s4 + $0x10] sm:$0xf] %vm372, %v360
    %378 = vst.msk [vmem:[%s4 + $0x14] sm:$0xf] %vm372, %v361
    %379 = vst.msk [vmem:[%s4 + $0x18] sm:$0xf] %vm372, %v362
    %380 = vst.msk [vmem:[%s4 + $0x1c] sm:$0xf] %vm372, %v363
  $region25: #{lp_generator_forward.3} parent=0 // pred_fallthru
    _
  // Predicated region
  $region26: #{lp_generator_forward.3} parent=0 // pred_check
    _
  $region27: #{lp_generator_forward.3} parent=0 // pred_check_branch
    %382 = sbr.rel (0) target = $region29
  $region28: #{lp_generator_forward.3} parent=0 // pred_region
    _
  $region29: #{lp_generator_forward.3} parent=0 // pred_fallthru
    _
  // Predicated region
  $region30: #{lp_generator_forward.3} parent=0 // pred_check
    _
  $region31: #{lp_generator_forward.3} parent=0 // pred_check_branch
    %384 = sbr.rel (0) target = $region33
  $region32: #{lp_generator_forward.3} parent=0 // pred_region
    _
  $region33: #{lp_generator_forward.3} parent=0 // pred_fallthru
    _

// kernel: lp_generator_forward.4
$region0: #{lp_generator_forward.4}
  #allocation0 [shape = 'u32[]', space=smem, size = 0x4, offset = 0x4, fixed_abs, tag = 'smem constant byte address 0x4 - core index']
  #allocation1 [shape = 'u32[144,128]{1,0:T(1,128)}', space=vmem, size = 0x12000, scoped, tag = 'internal scratch']
  #allocation2 [shape = 'f32[64,16]{1,0:T(8,128)}', space=vmem, size = 0x8000, scoped, tag = 'scratch operand']
  %s0 = inlined_call_operand.vmem [shape: bf16[64,64], index: 0, kind: input, shape index: {}]
  %s1 = inlined_call_operand.vmem [shape: bf16[64,32], index: 1, kind: input, shape index: {}]
  %s2 = inlined_call_operand.vmem [shape: f32[32,16], index: 2, kind: input, shape index: {}]
  %s3 = inlined_call_operand.vmem [shape: f32[1,16], index: 3, kind: input, shape index: {}]
  %s4 = inlined_call_operand.vmem [shape: f32[16,16], index: 4, kind: input, shape index: {}]
  %s5 = inlined_call_operand.vmem [shape: f32[1,16], index: 5, kind: input, shape index: {}]
  %s6 = inlined_call_operand.vmem [shape: bf16[64,16], index: 6, kind: output, shape index: {0}]
  %s7 = inlined_call_operand.vmem [shape: bf16[64,16], index: 7, kind: output, shape index: {1}]
  %8 = xla_tuple %s6, %s7
  %s9 = sld [smem:[#allocation0]]
  $region50: #{lp_generator_forward.4} parent=0
    _
  %s11 = ssub.s32 1, %s9
  %s12 = scalar_select 0, %s11, %s9
  // Predicated region
  $region2: #{lp_generator_forward.4} parent=0 // pred_check
    _
  $region3: #{lp_generator_forward.4} parent=0 // pred_check_branch
    %14 = sbr.rel (0) target = $region5
  $region4: #{lp_generator_forward.4} parent=0 // pred_region
    _
  $region5: #{lp_generator_forward.4} parent=0 // pred_fallthru
    _
  // Predicated region
  $region6: #{lp_generator_forward.4} parent=0 // pred_check
    _
  $region7: #{lp_generator_forward.4} parent=0 // pred_check_branch
    %16 = sbr.rel (0) target = $region9
  $region8: #{lp_generator_forward.4} parent=0 // pred_region
    _
  $region9: #{lp_generator_forward.4} parent=0 // pred_fallthru
    _
  // Predicated region
  $region10: #{lp_generator_forward.4} parent=0 // pred_check
    _
  $region11: #{lp_generator_forward.4} parent=0 // pred_check_branch
    %18 = sbr.rel (0) target = $region13
  $region12: #{lp_generator_forward.4} parent=0 // pred_region
    _
  $region13: #{lp_generator_forward.4} parent=0 // pred_fallthru
    _
  // Predicated region
  $region14: #{lp_generator_forward.4} parent=0 // pred_check
    _
  $region15: #{lp_generator_forward.4} parent=0 // pred_check_branch
    %20 = sbr.rel (0) target = $region17
  $region16: #{lp_generator_forward.4} parent=0 // pred_region
    _
  $region17: #{lp_generator_forward.4} parent=0 // pred_fallthru
    _
  // Predicated region
  $region18: #{lp_generator_forward.4} parent=0 // pred_check
    _
  $region19: #{lp_generator_forward.4} parent=0 // pred_check_branch
    %22 = sbr.rel (0) target = $region21
  $region20: #{lp_generator_forward.4} parent=0 // pred_region
    _
  $region21: #{lp_generator_forward.4} parent=0 // pred_fallthru
    _
  // Predicated region
  $region22: #{lp_generator_forward.4} parent=0 // pred_check
    _
  $region23: #{lp_generator_forward.4} parent=0 // pred_check_branch
    %24 = sbr.rel (0) target = $region25
  $region24: #{lp_generator_forward.4} parent=0 // pred_region
    _
  $region25: #{lp_generator_forward.4} parent=0 // pred_fallthru
    _
  %p26 = scmp.eq.s32.totalorder 0, 0
  // Predicated region
  $region26: #{lp_generator_forward.4} parent=0 // pred_check
    %p27 = pneg %p26
  $region27: #{lp_generator_forward.4} parent=0 // pred_check_branch
    %29 = sbr.rel (%p27) target = $region29
  $region28: #{lp_generator_forward.4} parent=0 // pred_region
    %vm30 = vcmask 130048
    %31 = vst.msk [vmem:[#allocation2] sm:$0xff] %vm30, 0.0
    %32 = vst.msk [vmem:[#allocation2 + $0x8] sm:$0xff] %vm30, 0.0
    %33 = vst.msk [vmem:[#allocation2 + $0x10] sm:$0xff] %vm30, 0.0
    %34 = vst.msk [vmem:[#allocation2 + $0x18] sm:$0xff] %vm30, 0.0
    %35 = vst.msk [vmem:[#allocation2 + $0x20] sm:$0xff] %vm30, 0.0
    %36 = vst.msk [vmem:[#allocation2 + $0x28] sm:$0xff] %vm30, 0.0
    %37 = vst.msk [vmem:[#allocation2 + $0x30] sm:$0xff] %vm30, 0.0
    %38 = vst.msk [vmem:[#allocation2 + $0x38] sm:$0xff] %vm30, 0.0
  $region29: #{lp_generator_forward.4} parent=0 // pred_fallthru
    _
  %v39 = vld [vmem:[%s1] sm:$0xf]
  %v40 = vld [vmem:[%s1 + $0x4] sm:$0xf]
  %v41 = vld [vmem:[%s1 + $0x8] sm:$0xf]
  %v42 = vld [vmem:[%s1 + $0xc] sm:$0xf]
  %v43 = vld [vmem:[%s1 + $0x10] sm:$0xf]
  %v44 = vld [vmem:[%s1 + $0x14] sm:$0xf]
  %v45 = vld [vmem:[%s1 + $0x18] sm:$0xf]
  %v46 = vld [vmem:[%s1 + $0x1c] sm:$0xf]
  %v47 = vld [vmem:[%s2] sm:$0xff]
  %v48 = vld [vmem:[%s2 + $0x8] sm:$0xff]
  %v49 = vld [vmem:[%s2 + $0x10] sm:$0xff]
  %v50 = vld [vmem:[%s2 + $0x18] sm:$0xff]
  %v59 = vunpack.c.l.b16 %v39
  %v60 = vunpack.c.l.b16 %v40
  %v61 = vunpack.c.l.b16 %v41
  %v62 = vunpack.c.l.b16 %v42
  %v63 = vunpack.c.l.b16 %v43
  %v64 = vunpack.c.l.b16 %v44
  %v65 = vunpack.c.l.b16 %v45
  %v66 = vunpack.c.l.b16 %v46
  %v67 = vpack.c.b16 %v60, %v59
  %v68 = vpack.c.b16 %v62, %v61
  %v69 = vpack.c.b16 %v64, %v63
  %v70 = vpack.c.b16 %v66, %v65
  %vm71 = vcmask 261120
  %v73 = vsel %vm71, %v67, 0
  %v76 = vsel %vm71, %v68, 0
  %v79 = vsel %vm71, %v69, 0
  %v82 = vsel %vm71, %v70, 0
  %84 = vmatprep.subr.mxu0 0.0
  %85 = vmatpush1.msra.mxu0 0.0
  %86 = vmatprep.subr.mxu0 0.0
  %87 = vmatpush1.msra.mxu0 0.0
  %88 = vmatprep.subr.mxu0 0.0
  %89 = vmatpush1.msra.mxu0 0.0
  %90 = vmatprep.subr.mxu0 0.0
  %91 = vmatpush1.msra.mxu0 0.0
  %92 = vmatprep.subr.mxu0 0.0
  %93 = vmatpush1.msra.mxu0 0.0
  %94 = vmatprep.subr.mxu0 0.0
  %95 = vmatpush1.msra.mxu0 0.0
  %96 = vmatprep.subr.mxu0 0.0
  %97 = vmatpush1.msra.mxu0 0.0
  %98 = vmatprep.subr.mxu0 0.0
  %99 = vmatpush1.msra.mxu0 0.0
  %100 = vmatprep.subr.mxu0 0.0
  %101 = vmatpush1.msra.mxu0 0.0
  %102 = vmatprep.subr.mxu0 0.0
  %103 = vmatpush1.msra.mxu0 0.0
  %104 = vmatprep.subr.mxu0 0.0
  %105 = vmatpush1.msra.mxu0 0.0
  %106 = vmatprep.subr.mxu0 0.0
  %107 = vmatpush1.msra.mxu0 0.0
  %108 = vmatprep.subr.mxu0 0.0
  %109 = vmatpush1.msra.mxu0 %v50
  %110 = vmatprep.subr.mxu0 0.0
  %111 = vmatpush1.msra.mxu0 %v49
  %112 = vmatprep.subr.mxu0 0.0
  %113 = vmatpush1.msra.mxu0 %v48
  %114 = vmatprep.subr.mxu0 0.0
  %115 = vmatpush1.msra.mxu0 %v47
  %116 = vmatprep.subr.mxu0 0.0
  %117 = vmatpush2.msra.mxu0 0.0
  %118 = vmatprep.subr.mxu0 0.0
  %119 = vmatpush2.msra.mxu0 0.0
  %120 = vmatprep.subr.mxu0 0.0
  %121 = vmatpush2.msra.mxu0 0.0
  %122 = vmatprep.subr.mxu0 0.0
  %123 = vmatpush2.msra.mxu0 0.0
  %124 = vmatprep.subr.mxu0 0.0
  %125 = vmatpush2.msra.mxu0 0.0
  %126 = vmatprep.subr.mxu0 0.0
  %127 = vmatpush2.msra.mxu0 0.0
  %128 = vmatprep.subr.mxu0 0.0
  %129 = vmatpush2.msra.mxu0 0.0
  %130 = vmatprep.subr.mxu0 0.0
  %131 = vmatpush2.msra.mxu0 0.0
  %132 = vmatprep.subr.mxu0 0.0
  %133 = vmatpush2.msra.mxu0 0.0
  %134 = vmatprep.subr.mxu0 0.0
  %135 = vmatpush2.msra.mxu0 0.0
  %136 = vmatprep.subr.mxu0 0.0
  %137 = vmatpush2.msra.mxu0 0.0
  %138 = vmatprep.subr.mxu0 0.0
  %139 = vmatpush2.msra.mxu0 0.0
  %140 = vmatprep.subr.mxu0 0.0
  %141 = vmatpush2.msra.mxu0 0.0
  %142 = vmatprep.subr.mxu0 0.0
  %143 = vmatpush2.msra.mxu0 0.0
  %144 = vmatprep.subr.mxu0 0.0
  %145 = vmatpush2.msra.mxu0 0.0
  %146 = vmatprep.subr.mxu0 0.0
  %147 = vmatpush2.msra.mxu0 0.0
  %148 = vmatprep.mubr.bf16.mxu0 0
  %149 = vmatmul.mubr.bf16.gmra.mxu0 %v73
  %v150 = vpop.f32.mrf.mxu0
  %v151 = vadd.f32 0.0, %v150
  %v152 = vpop.f32.mrf.mxu0
  %v153 = vpop.f32.mrf.mxu0
  %v154 = vadd.f32 0.0, %v153
  %v155 = vpop.f32.mrf.mxu0
  %156 = vmatprep.mubr.bf16.mxu0 0
  %157 = vmatmul.mubr.bf16.gmra.mxu0 %v76
  %v158 = vpop.f32.mrf.mxu0
  %v159 = vadd.f32 0.0, %v158
  %v160 = vpop.f32.mrf.mxu0
  %v161 = vpop.f32.mrf.mxu0
  %v162 = vadd.f32 0.0, %v161
  %v163 = vpop.f32.mrf.mxu0
  %164 = vmatprep.mubr.bf16.mxu0 0
  %165 = vmatmul.mubr.bf16.gmra.mxu0 %v79
  %v166 = vpop.f32.mrf.mxu0
  %v167 = vadd.f32 0.0, %v166
  %v168 = vpop.f32.mrf.mxu0
  %v169 = vpop.f32.mrf.mxu0
  %v170 = vadd.f32 0.0, %v169
  %v171 = vpop.f32.mrf.mxu0
  %172 = vmatprep.mubr.bf16.mxu0 0
  %173 = vmatmul.mubr.bf16.gmra.mxu0 %v82
  %v174 = vpop.f32.mrf.mxu0
  %v175 = vadd.f32 0.0, %v174
  %v176 = vpop.f32.mrf.mxu0
  %v177 = vpop.f32.mrf.mxu0
  %v178 = vadd.f32 0.0, %v177
  %v179 = vpop.f32.mrf.mxu0
  %180 = vdwg.mxu0
  %v181 = vld [vmem:[#allocation2] sm:$0xff]
  %v182 = vld [vmem:[#allocation2 + $0x8] sm:$0xff]
  %v183 = vld [vmem:[#allocation2 + $0x10] sm:$0xff]
  %v184 = vld [vmem:[#allocation2 + $0x18] sm:$0xff]
  %v185 = vld [vmem:[#allocation2 + $0x20] sm:$0xff]
  %v186 = vld [vmem:[#allocation2 + $0x28] sm:$0xff]
  %v187 = vld [vmem:[#allocation2 + $0x30] sm:$0xff]
  %v188 = vld [vmem:[#allocation2 + $0x38] sm:$0xff]
  %v189 = vld [vmem:[%s0] sm:$0xf]
  %v190 = vld [vmem:[%s0 + $0x4] sm:$0xf]
  %v191 = vld [vmem:[%s0 + $0x8] sm:$0xf]
  %v192 = vld [vmem:[%s0 + $0xc] sm:$0xf]
  %v193 = vld [vmem:[%s0 + $0x10] sm:$0xf]
  %v194 = vld [vmem:[%s0 + $0x14] sm:$0xf]
  %v195 = vld [vmem:[%s0 + $0x18] sm:$0xf]
  %v196 = vld [vmem:[%s0 + $0x1c] sm:$0xf]
  %v197 = vpack.c.bf16 %v154, %v151
  %v198 = vpack.c.bf16 %v162, %v159
  %v199 = vpack.c.bf16 %v170, %v167
  %v200 = vpack.c.bf16 %v178, %v175
  %v209 = vunpack.c.l.b16 %v189
  %v210 = vunpack.c.l.b16 %v190
  %v211 = vunpack.c.l.b16 %v191
  %v212 = vunpack.c.l.b16 %v192
  %v213 = vunpack.c.l.b16 %v193
  %v214 = vunpack.c.l.b16 %v194
  %v215 = vunpack.c.l.b16 %v195
  %v216 = vunpack.c.l.b16 %v196
  %v217 = vpack.c.b16 %v210, %v209
  %v218 = vpack.c.b16 %v212, %v211
  %v219 = vpack.c.b16 %v214, %v213
  %v220 = vpack.c.b16 %v216, %v215
  %vm221 = vcmask 523264
  %v223 = vsel %vm221, %v217, 0
  %v226 = vsel %vm221, %v218, 0
  %v229 = vsel %vm221, %v219, 0
  %v232 = vsel %vm221, %v220, 0
  %234 = vmatprep.subr.bf16.mxu0 0
  %235 = vmatpush1.bf16.msra.mxu0 0
  %236 = vmatprep.subr.bf16.mxu0 0
  %237 = vmatpush1.bf16.msra.mxu0 0
  %238 = vmatprep.subr.bf16.mxu0 0
  %239 = vmatpush1.bf16.msra.mxu0 0
  %240 = vmatprep.subr.bf16.mxu0 0
  %241 = vmatpush1.bf16.msra.mxu0 0
  %242 = vmatprep.subr.bf16.mxu0 0
  %243 = vmatpush1.bf16.msra.mxu0 %v200
  %244 = vmatprep.subr.bf16.mxu0 0
  %245 = vmatpush1.bf16.msra.mxu0 %v199
  %246 = vmatprep.subr.bf16.mxu0 0
  %247 = vmatpush1.bf16.msra.mxu0 %v198
  %248 = vmatprep.subr.bf16.mxu0 0
  %249 = vmatpush1.bf16.msra.mxu0 %v197
  %250 = vmatprep.subr.bf16.mxu0 0
  %251 = vmatpush2.bf16.msra.mxu0 0
  %252 = vmatprep.subr.bf16.mxu0 0
  %253 = vmatpush2.bf16.msra.mxu0 0
  %254 = vmatprep.subr.bf16.mxu0 0
  %255 = vmatpush2.bf16.msra.mxu0 0
  %256 = vmatprep.subr.bf16.mxu0 0
  %257 = vmatpush2.bf16.msra.mxu0 0
  %258 = vmatprep.subr.bf16.mxu0 0
  %259 = vmatpush2.bf16.msra.mxu0 0
  %260 = vmatprep.subr.bf16.mxu0 0
  %261 = vmatpush2.bf16.msra.mxu0 0
  %262 = vmatprep.subr.bf16.mxu0 0
  %263 = vmatpush2.bf16.msra.mxu0 0
  %264 = vmatprep.subr.bf16.mxu0 0
  %265 = vmatpush2.bf16.msra.mxu0 0
  %266 = vmatprep.mubr.bf16.mxu0 0
  %267 = vmatmul.mubr.bf16.gmra.mxu0 %v223
  %v268 = vpop.f32.mrf.mxu0
  %v269 = vadd.f32 0.0, %v268
  %v270 = vpop.f32.mrf.mxu0
  %v271 = vpop.f32.mrf.mxu0
  %v272 = vadd.f32 0.0, %v271
  %v273 = vpop.f32.mrf.mxu0
  %274 = vmatprep.mubr.bf16.mxu0 0
  %275 = vmatmul.mubr.bf16.gmra.mxu0 %v226
  %v276 = vpop.f32.mrf.mxu0
  %v277 = vadd.f32 0.0, %v276
  %v278 = vpop.f32.mrf.mxu0
  %v279 = vpop.f32.mrf.mxu0
  %v280 = vadd.f32 0.0, %v279
  %v281 = vpop.f32.mrf.mxu0
  %282 = vmatprep.mubr.bf16.mxu0 0
  %283 = vmatmul.mubr.bf16.gmra.mxu0 %v229
  %v284 = vpop.f32.mrf.mxu0
  %v285 = vadd.f32 0.0, %v284
  %v286 = vpop.f32.mrf.mxu0
  %v287 = vpop.f32.mrf.mxu0
  %v288 = vadd.f32 0.0, %v287
  %v289 = vpop.f32.mrf.mxu0
  %290 = vmatprep.mubr.bf16.mxu0 0
  %291 = vmatmul.mubr.bf16.gmra.mxu0 %v232
  %v292 = vpop.f32.mrf.mxu0
  %v293 = vadd.f32 0.0, %v292
  %v294 = vpop.f32.mrf.mxu0
  %v295 = vpop.f32.mrf.mxu0
  %v296 = vadd.f32 0.0, %v295
  %v297 = vpop.f32.mrf.mxu0
  %298 = vdwg.mxu0
  %v299 = vadd.f32 %v181, %v269
  %v300 = vadd.f32 %v182, %v272
  %v301 = vadd.f32 %v183, %v277
  %v302 = vadd.f32 %v184, %v280
  %v303 = vadd.f32 %v185, %v285
  %v304 = vadd.f32 %v186, %v288
  %v305 = vadd.f32 %v187, %v293
  %v306 = vadd.f32 %v188, %v296
  %vm307 = vcmask 130048
  %308 = vst.msk [vmem:[#allocation2] sm:$0xff] %vm307, %v299
  %309 = vst.msk [vmem:[#allocation2 + $0x8] sm:$0xff] %vm307, %v300
  %310 = vst.msk [vmem:[#allocation2 + $0x10] sm:$0xff] %vm307, %v301
  %311 = vst.msk [vmem:[#allocation2 + $0x18] sm:$0xff] %vm307, %v302
  %312 = vst.msk [vmem:[#allocation2 + $0x20] sm:$0xff] %vm307, %v303
  %313 = vst.msk [vmem:[#allocation2 + $0x28] sm:$0xff] %vm307, %v304
  %314 = vst.msk [vmem:[#allocation2 + $0x30] sm:$0xff] %vm307, %v305
  %315 = vst.msk [vmem:[#allocation2 + $0x38] sm:$0xff] %vm307, %v306
  // Predicated region
  $region30: #{lp_generator_forward.4} parent=0 // pred_check
    %p316 = pneg %p26
  $region31: #{lp_generator_forward.4} parent=0 // pred_check_branch
    %318 = sbr.rel (%p316) target = $region33
  $region32: #{lp_generator_forward.4} parent=0 // pred_region
    %v319 = vld [vmem:[#allocation2] sm:$0xff]
    %v320 = vld [vmem:[#allocation2 + $0x8] sm:$0xff]
    %v321 = vld [vmem:[#allocation2 + $0x10] sm:$0xff]
    %v322 = vld [vmem:[#allocation2 + $0x18] sm:$0xff]
    %v323 = vld [vmem:[#allocation2 + $0x20] sm:$0xff]
    %v324 = vld [vmem:[#allocation2 + $0x28] sm:$0xff]
    %v325 = vld [vmem:[#allocation2 + $0x30] sm:$0xff]
    %v326 = vld [vmem:[#allocation2 + $0x38] sm:$0xff]
    %v327 = vld [vmem:[%s3] sm:$0x1]
    %v329 = vlaneseq
    %v330 = vshrl.u32 %v329, 7
    %v331 = vsub.s32 0, %v330
    %v332 = vrot.slane %v327, %v331
    %v334 = vadd.f32 %v319, %v332
    %v335 = vadd.f32 %v320, %v332
    %v336 = vadd.f32 %v321, %v332
    %v337 = vadd.f32 %v322, %v332
    %v338 = vadd.f32 %v323, %v332
    %v339 = vadd.f32 %v324, %v332
    %v340 = vadd.f32 %v325, %v332
    %v341 = vadd.f32 %v326, %v332
    %v342 = vld [vmem:[%s4] sm:$0xff]
    %v343 = vld [vmem:[%s4 + $0x8] sm:$0xff]
    %v344 = vld [vmem:[%s5] sm:$0x1]
    %v346 = vlaneseq
    %v347 = vshrl.u32 %v346, 7
    %v348 = vsub.s32 0, %v347
    %v349 = vrot.slane %v344, %v348
    %v352 = vsel %vm307, %v334, 0
    %v355 = vsel %vm307, %v335, 0
    %v358 = vsel %vm307, %v336, 0
    %v361 = vsel %vm307, %v337, 0
    %v364 = vsel %vm307, %v338, 0
    %v367 = vsel %vm307, %v339, 0
    %v370 = vsel %vm307, %v340, 0
    %v373 = vsel %vm307, %v341, 0
    %375 = vmatprep.subr.mxu0 0.0
    %376 = vmatpush1.msra.mxu0 0.0
    %377 = vmatprep.subr.mxu0 0.0
    %378 = vmatpush1.msra.mxu0 0.0
    %379 = vmatprep.subr.mxu0 0.0
    %380 = vmatpush1.msra.mxu0 0.0
    %381 = vmatprep.subr.mxu0 0.0
    %382 = vmatpush1.msra.mxu0 0.0
    %383 = vmatprep.subr.mxu0 0.0
    %384 = vmatpush1.msra.mxu0 0.0
    %385 = vmatprep.subr.mxu0 0.0
    %386 = vmatpush1.msra.mxu0 0.0
    %387 = vmatprep.subr.mxu0 0.0
    %388 = vmatpush1.msra.mxu0 0.0
    %389 = vmatprep.subr.mxu0 0.0
    %390 = vmatpush1.msra.mxu0 0.0
    %391 = vmatprep.subr.mxu0 0.0
    %392 = vmatpush1.msra.mxu0 0.0
    %393 = vmatprep.subr.mxu0 0.0
    %394 = vmatpush1.msra.mxu0 0.0
    %395 = vmatprep.subr.mxu0 0.0
    %396 = vmatpush1.msra.mxu0 0.0
    %397 = vmatprep.subr.mxu0 0.0
    %398 = vmatpush1.msra.mxu0 0.0
    %399 = vmatprep.subr.mxu0 0.0
    %400 = vmatpush1.msra.mxu0 0.0
    %401 = vmatprep.subr.mxu0 0.0
    %402 = vmatpush1.msra.mxu0 0.0
    %403 = vmatprep.subr.mxu0 0.0
    %404 = vmatpush1.msra.mxu0 %v343
    %405 = vmatprep.subr.mxu0 0.0
    %406 = vmatpush1.msra.mxu0 %v342
    %407 = vmatprep.subr.mxu0 0.0
    %408 = vmatpush2.msra.mxu0 0.0
    %409 = vmatprep.subr.mxu0 0.0
    %410 = vmatpush2.msra.mxu0 0.0
    %411 = vmatprep.subr.mxu0 0.0
    %412 = vmatpush2.msra.mxu0 0.0
    %413 = vmatprep.subr.mxu0 0.0
    %414 = vmatpush2.msra.mxu0 0.0
    %415 = vmatprep.subr.mxu0 0.0
    %416 = vmatpush2.msra.mxu0 0.0
    %417 = vmatprep.subr.mxu0 0.0
    %418 = vmatpush2.msra.mxu0 0.0
    %419 = vmatprep.subr.mxu0 0.0
    %420 = vmatpush2.msra.mxu0 0.0
    %421 = vmatprep.subr.mxu0 0.0
    %422 = vmatpush2.msra.mxu0 0.0
    %423 = vmatprep.subr.mxu0 0.0
    %424 = vmatpush2.msra.mxu0 0.0
    %425 = vmatprep.subr.mxu0 0.0
    %426 = vmatpush2.msra.mxu0 0.0
    %427 = vmatprep.subr.mxu0 0.0
    %428 = vmatpush2.msra.mxu0 0.0
    %429 = vmatprep.subr.mxu0 0.0
    %430 = vmatpush2.msra.mxu0 0.0
    %431 = vmatprep.subr.mxu0 0.0
    %432 = vmatpush2.msra.mxu0 0.0
    %433 = vmatprep.subr.mxu0 0.0
    %434 = vmatpush2.msra.mxu0 0.0
    %435 = vmatprep.subr.mxu0 0.0
    %436 = vmatpush2.msra.mxu0 0.0
    %437 = vmatprep.subr.mxu0 0.0
    %438 = vmatpush2.msra.mxu0 0.0
    %439 = vmatprep.mubr.f32.mxu0 0.0
    %440 = vmatmul.mubr.f32.gmra.mxu0 %v352
    %v441 = vpop.f32.mrf.mxu0
    %v442 = vadd.f32 %v349, %v441
    %v443 = vpop.f32.mrf.mxu0
    %444 = vmatprep.mubr.f32.mxu0 0.0
    %445 = vmatmul.mubr.f32.gmra.mxu0 %v355
    %v446 = vpop.f32.mrf.mxu0
    %v447 = vadd.f32 %v349, %v446
    %v448 = vpop.f32.mrf.mxu0
    %449 = vmatprep.mubr.f32.mxu0 0.0
    %450 = vmatmul.mubr.f32.gmra.mxu0 %v358
    %v451 = vpop.f32.mrf.mxu0
    %v452 = vadd.f32 %v349, %v451
    %v453 = vpop.f32.mrf.mxu0
    %454 = vmatprep.mubr.f32.mxu0 0.0
    %455 = vmatmul.mubr.f32.gmra.mxu0 %v361
    %v456 = vpop.f32.mrf.mxu0
    %v457 = vadd.f32 %v349, %v456
    %v458 = vpop.f32.mrf.mxu0
    %459 = vmatprep.mubr.f32.mxu0 0.0
    %460 = vmatmul.mubr.f32.gmra.mxu0 %v364
    %v461 = vpop.f32.mrf.mxu0
    %v462 = vadd.f32 %v349, %v461
    %v463 = vpop.f32.mrf.mxu0
    %464 = vmatprep.mubr.f32.mxu0 0.0
    %465 = vmatmul.mubr.f32.gmra.mxu0 %v367
    %v466 = vpop.f32.mrf.mxu0
    %v467 = vadd.f32 %v349, %v466
    %v468 = vpop.f32.mrf.mxu0
    %469 = vmatprep.mubr.f32.mxu0 0.0
    %470 = vmatmul.mubr.f32.gmra.mxu0 %v370
    %v471 = vpop.f32.mrf.mxu0
    %v472 = vadd.f32 %v349, %v471
    %v473 = vpop.f32.mrf.mxu0
    %474 = vmatprep.mubr.f32.mxu0 0.0
    %475 = vmatmul.mubr.f32.gmra.mxu0 %v373
    %v476 = vpop.f32.mrf.mxu0
    %v477 = vadd.f32 %v349, %v476
    %v478 = vpop.f32.mrf.mxu0
    %479 = vdwg.mxu0
    %v480 = vpack.c.bf16 %v335, %v334
    %v481 = vpack.c.bf16 %v337, %v336
    %v482 = vpack.c.bf16 %v339, %v338
    %v483 = vpack.c.bf16 %v341, %v340
    %v488 = vunpack.c.l.b16 %v480
    %v489 = vunpack.c.h.b16 %v480
    %v490 = vunpack.c.l.b16 %v481
    %v491 = vunpack.c.h.b16 %v481
    %v492 = vunpack.c.l.b16 %v482
    %v493 = vunpack.c.h.b16 %v482
    %v494 = vunpack.c.l.b16 %v483
    %v495 = vunpack.c.h.b16 %v483
    %v496 = vpack.c.b16 %v488, %v488
    %v497 = vpack.c.b16 %v489, %v489
    %v498 = vpack.c.b16 %v490, %v490
    %v499 = vpack.c.b16 %v491, %v491
    %v500 = vpack.c.b16 %v492, %v492
    %v501 = vpack.c.b16 %v493, %v493
    %v502 = vpack.c.b16 %v494, %v494
    %v503 = vpack.c.b16 %v495, %v495
    %vm512 = vcmask 125952
    %513 = vst.msk [vmem:[%s6] sm:$0xf] %vm512, %v496
    %514 = vst.msk [vmem:[%s6 + $0x4] sm:$0xf] %vm512, %v497
    %515 = vst.msk [vmem:[%s6 + $0x8] sm:$0xf] %vm512, %v498
    %516 = vst.msk [vmem:[%s6 + $0xc] sm:$0xf] %vm512, %v499
    %517 = vst.msk [vmem:[%s6 + $0x10] sm:$0xf] %vm512, %v500
    %518 = vst.msk [vmem:[%s6 + $0x14] sm:$0xf] %vm512, %v501
    %519 = vst.msk [vmem:[%s6 + $0x18] sm:$0xf] %vm512, %v502
    %520 = vst.msk [vmem:[%s6 + $0x1c] sm:$0xf] %vm512, %v503
    %v521 = vpack.c.bf16 %v447, %v442
    %v522 = vpack.c.bf16 %v457, %v452
    %v523 = vpack.c.bf16 %v467, %v462
    %v524 = vpack.c.bf16 %v477, %v472
    %v529 = vunpack.c.l.b16 %v521
    %v530 = vunpack.c.h.b16 %v521
    %v531 = vunpack.c.l.b16 %v522
    %v532 = vunpack.c.h.b16 %v522
    %v533 = vunpack.c.l.b16 %v523
    %v534 = vunpack.c.h.b16 %v523
    %v535 = vunpack.c.l.b16 %v524
    %v536 = vunpack.c.h.b16 %v524
    %v537 = vpack.c.b16 %v529, %v529
    %v538 = vpack.c.b16 %v530, %v530
    %v539 = vpack.c.b16 %v531, %v531
    %v540 = vpack.c.b16 %v532, %v532
    %v541 = vpack.c.b16 %v533, %v533
    %v542 = vpack.c.b16 %v534, %v534
    %v543 = vpack.c.b16 %v535, %v535
    %v544 = vpack.c.b16 %v536, %v536
    %553 = vst.msk [vmem:[%s7] sm:$0xf] %vm512, %v537
    %554 = vst.msk [vmem:[%s7 + $0x4] sm:$0xf] %vm512, %v538
    %555 = vst.msk [vmem:[%s7 + $0x8] sm:$0xf] %vm512, %v539
    %556 = vst.msk [vmem:[%s7 + $0xc] sm:$0xf] %vm512, %v540
    %557 = vst.msk [vmem:[%s7 + $0x10] sm:$0xf] %vm512, %v541
    %558 = vst.msk [vmem:[%s7 + $0x14] sm:$0xf] %vm512, %v542
    %559 = vst.msk [vmem:[%s7 + $0x18] sm:$0xf] %vm512, %v543
    %560 = vst.msk [vmem:[%s7 + $0x1c] sm:$0xf] %vm512, %v544
  $region33: #{lp_generator_forward.4} parent=0 // pred_fallthru
    _
  // Predicated region
  $region34: #{lp_generator_forward.4} parent=0 // pred_check
    _
  $region35: #{lp_generator_forward.4} parent=0 // pred_check_branch
    %562 = sbr.rel (0) target = $region37
  $region36: #{lp_generator_forward.4} parent=0 // pred_region
    _
  $region37: #{lp_generator_forward.4} parent=0 // pred_fallthru
    _
  // Predicated region
  $region38: #{lp_generator_forward.4} parent=0 // pred_check
    _
  $region39: #{lp_generator_forward.4} parent=0 // pred_check_branch
    %564 = sbr.rel (0) target = $region41
  $region40: #{lp_generator_forward.4} parent=0 // pred_region
    _
  $region41: #{lp_generator_forward.4} parent=0 // pred_fallthru
    _
  // Predicated region
  $region42: #{lp_generator_forward.4} parent=0 // pred_check
    _
  $region43: #{lp_generator_forward.4} parent=0 // pred_check_branch
    %566 = sbr.rel (0) target = $region45
  $region44: #{lp_generator_forward.4} parent=0 // pred_region
    _
  $region45: #{lp_generator_forward.4} parent=0 // pred_fallthru
    _
  // Predicated region
  $region46: #{lp_generator_forward.4} parent=0 // pred_check
    _
  $region47: #{lp_generator_forward.4} parent=0 // pred_check_branch
    %568 = sbr.rel (0) target = $region49
  $region48: #{lp_generator_forward.4} parent=0 // pred_region
    _
  $region49: #{lp_generator_forward.4} parent=0 // pred_fallthru
    _

</llo_original>
